<compile_context>
chip_gen: v7x
topology: tpu7x:2x2x1
jax: 0.10.0
libtpu: 0.0.40
codegen_flags: <defaults>
</compile_context>

<pallas_src>
import functools

import numpy as np
import jax
import jax.numpy as jnp
from jax import lax
from jax.experimental import pallas as pl
from jax.experimental.pallas import tpu as pltpu

DIM = 64
NUM_HEADS = 2
HEAD_DIM = DIM // NUM_HEADS
C = DIM                       # per-tensor feature width
PAIR = 2 * C                  # paired slab width ([k|v] / [q|g])
LN_EPS = 1e-5

DENSE_TILE = 1024             # row tile of the fused projection kernel
GROUP_CHUNK = 256             # rows per streamed chunk for large windows
SMALL_CHUNK = 64              # single-shot read for small windows
OUT_TILE = 256                # row tile of the output kernel
ROW_ALIGN = 16                # bf16 sublane tile (16, 128)


def _round_up(a, b):
    return ((a + b - 1) // b) * b


# --------------------------------------------------------------------------
# pass 0: fused qkv projection (+ optional positional encoding), emitting the
# paired bf16 slabs qg = [q|g] and kvp = [k|v].
# --------------------------------------------------------------------------
def _qkv_proj_kernel(x_ref, w_ref, b_ref, qg_ref, kvp_ref):
    y = jnp.dot(x_ref[...], w_ref[...],
                preferred_element_type=jnp.float32) + b_ref[...]
    qg_ref[...] = y[:, :PAIR].astype(jnp.bfloat16)
    kvp_ref[...] = y[:, PAIR:].astype(jnp.bfloat16)


def _qkv_proj_pe_kernel(x_ref, pe_ref, w_ref, b_ref, qg_ref, kvp_ref):
    y = jnp.dot(x_ref[...], w_ref[...],
                preferred_element_type=jnp.float32) + b_ref[...]
    pe = pe_ref[...]
    pe_half = jnp.concatenate([pe, jnp.zeros_like(pe)], axis=1)   # [pe | 0]
    qg_ref[...] = (y[:, :PAIR] + pe_half).astype(jnp.bfloat16)    # q += pe
    kvp_ref[...] = (y[:, PAIR:] + pe_half).astype(jnp.bfloat16)   # k += pe


def qkv_project(x, w_ord, b_ord, pe, *, tile):
    n_rows, cin = x.shape
    row_spec = pl.BlockSpec((tile, cin), lambda i: (i, 0))
    if pe is not None:
        kernel = _qkv_proj_pe_kernel
        in_specs = [row_spec, row_spec]
        args = (x, pe)
    else:
        kernel = _qkv_proj_kernel
        in_specs = [row_spec]
        args = (x,)
    in_specs += [pl.BlockSpec((cin, 4 * C), lambda i: (0, 0)),
                 pl.BlockSpec((1, 4 * C), lambda i: (0, 0))]
    out_spec = pl.BlockSpec((tile, PAIR), lambda i: (i, 0))
    return pl.pallas_call(
        kernel,
        out_shape=(jax.ShapeDtypeStruct((n_rows, PAIR), jnp.bfloat16),
                   jax.ShapeDtypeStruct((n_rows, PAIR), jnp.bfloat16)),
        grid_spec=pltpu.PrefetchScalarGridSpec(
            num_scalar_prefetch=0,
            grid=(n_rows // tile,),
            in_specs=in_specs,
            out_specs=[out_spec, out_spec]),
        compiler_params=pltpu.CompilerParams(
            dimension_semantics=("parallel",)),
    )(*args, w_ord, b_ord)


# --------------------------------------------------------------------------
# pass A: per-window kv accumulation (ScatterMatmulKV forward).
# --------------------------------------------------------------------------
def _group_kv_kernel(off_ref, cnt_ref, kvp_hbm, kv_ref,
                     pbuf, sbuf, accbuf, sem, *, G, GS, D):
    m = pl.program_id(0)
    start = off_ref[m]
    count = cnt_ref[m]
    r0a = pl.multiple_of((start // ROW_ALIGN) * ROW_ALIGN, ROW_ALIGN)
    shift = start - r0a
    total = shift + count

    # -- small windows: one SMALL_CHUNK-row read, one MXU pass -------------
    @pl.when(total <= GS)
    def _():
        cp = pltpu.make_async_copy(kvp_hbm.at[pl.ds(r0a, GS), :], sbuf,
                                   sem.at[0])
        cp.start()
        cp.wait()
        rid = lax.broadcasted_iota(jnp.int32, (GS, 1), 0)
        valid = jnp.logical_and(rid >= shift, rid < total)
        chunk = sbuf[...]
        pm = jnp.where(valid, chunk, jnp.zeros_like(chunk))
        accbuf[...] = lax.dot_general(
            pm, pm, (((0,), (0,)), ((), ())),
            preferred_element_type=jnp.float32)

    # -- large windows: double-buffered GROUP_CHUNK streaming --------------
    @pl.when(total > GS)
    def _():
        nchunks = (total + G - 1) // G

        def chunk_copy(s, slot):
            r0 = pl.multiple_of(r0a + s * G, ROW_ALIGN)
            return pltpu.make_async_copy(kvp_hbm.at[pl.ds(r0, G), :],
                                         pbuf.at[slot], sem.at[slot])

        chunk_copy(0, 0).start()
        rid = lax.broadcasted_iota(jnp.int32, (G, 1), 0)

        def body(s, acc):
            slot = s & 1
            chunk_copy(s, slot).wait()

            @pl.when(s + 1 < nchunks)
            def _():
                chunk_copy(s + 1, 1 - slot).start()

            gr = s * G + rid
            valid = jnp.logical_and(gr >= shift, gr < total)
            chunk = pbuf[slot]
            pm = jnp.where(valid, chunk, jnp.zeros_like(chunk))
            # one (G,128)x(G,128)->(128,128) contraction: full MXU lane fill,
            # single mask, no per-chunk 64-lane slices.
            return acc + lax.dot_general(
                pm, pm, (((0,), (0,)), ((), ())),
                preferred_element_type=jnp.float32)

        accbuf[...] = lax.fori_loop(
            0, nchunks, body, jnp.zeros((PAIR, PAIR), jnp.float32))

    # -- epilogue: extract k^T v block, keep per-head diagonal blocks ------
    acc = accbuf[...]
    kv = acc[:C, C:]                                   # = k^T v  (C, C)
    rh = lax.broadcasted_iota(jnp.int32, (C, C), 0) // D
    ch = lax.broadcasted_iota(jnp.int32, (C, C), 1) // D
    kv_ref[0] = jnp.where(rh == ch, kv, 0.0)


def group_kv(kvp, offsets, counts, *, num_groups):
    kernel = functools.partial(_group_kv_kernel, G=GROUP_CHUNK,
                               GS=SMALL_CHUNK, D=HEAD_DIM)
    return pl.pallas_call(
        kernel,
        out_shape=jax.ShapeDtypeStruct((num_groups, C, C), jnp.float32),
        grid_spec=pltpu.PrefetchScalarGridSpec(
            num_scalar_prefetch=2,
            grid=(num_groups,),
            in_specs=[pl.BlockSpec(memory_space=pl.ANY)],
            out_specs=pl.BlockSpec((1, C, C), lambda m, off, cnt: (m, 0, 0)),
            scratch_shapes=[
                pltpu.VMEM((2, GROUP_CHUNK, PAIR), jnp.bfloat16),  # chunk dbuf
                pltpu.VMEM((SMALL_CHUNK, PAIR), jnp.bfloat16),     # small path
                pltpu.VMEM((PAIR, PAIR), jnp.float32),             # accumulator
                pltpu.SemaphoreType.DMA((2,)),
            ]),
        compiler_params=pltpu.CompilerParams(
            dimension_semantics=("parallel",)),
    )(offsets, counts, kvp)


# --------------------------------------------------------------------------
# pass B: o = q @ kv[group(row)], per-head LayerNorm, silu(g) gate, out proj.
# Each 256-row output tile is written exactly once (auto-pipelined out spec).
# --------------------------------------------------------------------------
def _attn_out_kernel(off_ref, cnt_ref, glo_ref, gnum_ref,
                     qg_ref, kv_hbm, lnw_ref, lnb_ref, pw_ref,
                     o_ref, kvbuf, sem, *, TR, D):
    t = pl.program_id(0)
    g0 = glo_ref[t]
    ng = gnum_ref[t]

    qg = qg_ref[...]                               # (TR, 128) bf16
    q = qg[:, :C].astype(jnp.float32)              # (TR, C)
    row_ids = t * TR + lax.broadcasted_iota(jnp.int32, (TR, 1), 0)

    def kv_copy(i, slot):
        return pltpu.make_async_copy(kv_hbm.at[g0 + i], kvbuf.at[slot],
                                     sem.at[slot])

    @pl.when(ng > 0)
    def _():
        kv_copy(0, 0).start()

    def body(i, acc):
        slot = i & 1
        kv_copy(i, slot).wait()

        @pl.when(i + 1 < ng)
        def _():
            kv_copy(i + 1, 1 - slot).start()

        gi = g0 + i
        start = off_ref[gi]
        cnt = cnt_ref[gi]
        valid = jnp.logical_and(row_ids >= start, row_ids < start + cnt)
        contrib = jnp.dot(q, kvbuf[slot], preferred_element_type=jnp.float32)
        return jnp.where(valid, contrib, acc)

    o = lax.fori_loop(0, ng, body, jnp.zeros((TR, C), jnp.float32))

    # per-head LayerNorm with exact f32 statistics (VPU selects + XLU reduces,
    # no DEFAULT-precision MXU rounding in the mean/variance).
    colh = lax.broadcasted_iota(jnp.int32, (1, C), 1) // D
    mu = jnp.zeros_like(o)
    for h in range(C // D):
        msk = colh == h
        s = jnp.sum(jnp.where(msk, o, 0.0), axis=1, keepdims=True)
        mu = jnp.where(msk, s * (1.0 / D), mu)
    cen = o - mu
    sq = cen * cen
    var = jnp.zeros_like(o)
    for h in range(C // D):
        msk = colh == h
        s = jnp.sum(jnp.where(msk, sq, 0.0), axis=1, keepdims=True)
        var = jnp.where(msk, s * (1.0 / D), var)
    y = cen * lax.rsqrt(var + LN_EPS) * lnw_ref[...] + lnb_ref[...]

    g = qg[:, C:].astype(jnp.float32)
    res = (g * jax.nn.sigmoid(g)) * y
    o_ref[...] = jnp.dot(res, pw_ref[...], preferred_element_type=jnp.float32)


def attn_output(qg, kv, offsets, counts, g_lo, g_num, lnw, lnb, proj_w, *, tile):
    n_pad = qg.shape[0]
    kernel = functools.partial(_attn_out_kernel, TR=tile, D=HEAD_DIM)
    return pl.pallas_call(
        kernel,
        out_shape=jax.ShapeDtypeStruct((n_pad, C), jnp.float32),
        grid_spec=pltpu.PrefetchScalarGridSpec(
            num_scalar_prefetch=4,
            grid=(n_pad // tile,),
            in_specs=[pl.BlockSpec((tile, PAIR), lambda t, *_: (t, 0)),   # qg
                      pl.BlockSpec(memory_space=pl.ANY),                  # kv
                      pl.BlockSpec((1, C), lambda t, *_: (0, 0)),         # ln_w
                      pl.BlockSpec((1, C), lambda t, *_: (0, 0)),         # ln_b
                      pl.BlockSpec((C, C), lambda t, *_: (0, 0))],        # proj
            out_specs=pl.BlockSpec((tile, C), lambda t, *_: (t, 0)),
            scratch_shapes=[pltpu.VMEM((2, C, C), jnp.float32),
                            pltpu.SemaphoreType.DMA((2,))]),
        compiler_params=pltpu.CompilerParams(
            dimension_semantics=("parallel",)),
    )(offsets, counts, g_lo, g_num, qg, kv, lnw, lnb, proj_w)


# --------------------------------------------------------------------------
# module forward
# --------------------------------------------------------------------------
def init_params(key, dim, num_heads):
    head_dim = dim // num_heads
    k1, k2, k3, k4, k5 = jax.random.split(key, 5)
    s = 1.0 / np.sqrt(dim)
    return {
        # torch Linear weights stored pre-transposed: (in_features, out_features)
        "qkv_w": jax.random.uniform(k1, (dim, 4 * dim), jnp.float32, -s, s),
        "qkv_b": jax.random.uniform(k2, (4 * dim,), jnp.float32, -s, s),
        "ln_w": 1.0 + 0.1 * jax.random.normal(k3, (head_dim,), jnp.float32),
        "ln_b": 0.1 * jax.random.normal(k4, (head_dim,), jnp.float32),
        "proj_w": jax.random.uniform(k5, (dim, dim), jnp.float32, -s, s),
    }


def scatter_attention_forward(params, x, offsets, counts, batch_win_inds=None,
                              pe=None):
    del batch_win_inds                      # unused by the reference forward
    N, dim = x.shape
    H = NUM_HEADS
    M = offsets.shape[0]
    n_pad = _round_up(N + GROUP_CHUNK, DENSE_TILE)   # DENSE_TILE % OUT_TILE == 0

    xp = jnp.pad(x, ((0, n_pad - N), (0, 0)))
    pep = jnp.pad(pe, ((0, n_pad - N), (0, 0))) if pe is not None else None

    # Reorder the fused qkv weight columns to [q | g | k | v] so the kernel's
    # two 128-wide output slabs are contiguous lane slices of ONE (64,256)
    # matmul result.
    W, b = params["qkv_w"], params["qkv_b"]
    wq, wk, wv, wg = (W[:, i * C:(i + 1) * C] for i in range(4))
    bq, bk, bv, bg = (b[i * C:(i + 1) * C] for i in range(4))
    w_ord = jnp.concatenate([wq, wg, wk, wv], axis=1)
    b_ord = jnp.concatenate([bq, bg, bk, bv]).reshape(1, 4 * C)

    qg, kvp = qkv_project(xp, w_ord, b_ord, pep, tile=DENSE_TILE)

    offsets32 = offsets.astype(jnp.int32)
    counts32 = counts.astype(jnp.int32)

    kv = group_kv(kvp, offsets32, counts32, num_groups=M)

    # Contiguous run of windows intersecting each output row-tile.
    num_tiles = n_pad // OUT_TILE
    tile_start = jnp.arange(num_tiles, dtype=jnp.int32) * OUT_TILE
    tile_last = jnp.minimum(tile_start + OUT_TILE, N) - 1
    g_lo = jnp.searchsorted(offsets32, tile_start, side="right").astype(jnp.int32) - 1
    g_hi = jnp.searchsorted(offsets32, tile_last, side="right").astype(jnp.int32) - 1
    g_lo = jnp.clip(g_lo, 0, M - 1)
    g_hi = jnp.clip(g_hi, 0, M - 1)
    g_num = jnp.where(tile_start < N, g_hi - g_lo + 1, 0).astype(jnp.int32)

    lnw = jnp.tile(params["ln_w"], H).reshape(1, C)
    lnb = jnp.tile(params["ln_b"], H).reshape(1, C)

    out = attn_output(qg, kv, offsets32, counts32, g_lo, g_num,
                      lnw, lnb, params["proj_w"], tile=OUT_TILE)
    return out[:N]


# --------------------------------------------------------------------------
# pure numpy reference for verification
# --------------------------------------------------------------------------
def reference_forward(params, x, offsets, counts, pe=None):
    x = np.asarray(x, np.float64)
    w_qkv = np.asarray(params["qkv_w"], np.float64)
    b_qkv = np.asarray(params["qkv_b"], np.float64)
    N, Cd = x.shape
    H, D = NUM_HEADS, Cd // NUM_HEADS
    qkv = (x @ w_qkv + b_qkv).reshape(N, 4, Cd)
    q, k, v, g = qkv[:, 0], qkv[:, 1], qkv[:, 2], qkv[:, 3]
    if pe is not None:
        q = q + np.asarray(pe, np.float64)
        k = k + np.asarray(pe, np.float64)
    qh, kh, vh = (t.reshape(N, H, D) for t in (q, k, v))
    offs = np.asarray(offsets)
    cnts = np.asarray(counts)
    o = np.zeros((N, H, D), np.float64)
    for m in range(len(offs)):
        s, c = int(offs[m]), int(cnts[m])
        for h in range(H):
            kvm = kh[s:s + c, h].T @ vh[s:s + c, h]
            o[s:s + c, h] = qh[s:s + c, h] @ kvm
    mu = o.mean(-1, keepdims=True)
    var = ((o - mu) ** 2).mean(-1, keepdims=True)
    on = (o - mu) / np.sqrt(var + LN_EPS)
    on = on * np.asarray(params["ln_w"], np.float64) + np.asarray(params["ln_b"], np.float64)
    on = on.reshape(N, Cd)
    silu = g / (1.0 + np.exp(-g))
    return (silu * on) @ np.asarray(params["proj_w"], np.float64)


if __name__ == "__main__":
    key = jax.random.PRNGKey(0)
    pk, xk, pek = jax.random.split(key, 3)
    params = init_params(pk, DIM, NUM_HEADS)

    # 6 windows tiling [0, N); sizes give unaligned offsets, tiny windows
    # (small-read fast path) and windows spanning multiple output tiles.
    counts = jnp.array([5, 27, 200, 17, 151, 40], jnp.int32)
    offsets = jnp.concatenate(
        [jnp.zeros((1,), jnp.int32), jnp.cumsum(counts)[:-1].astype(jnp.int32)])
    N = int(np.asarray(counts).sum())
    x = jax.random.normal(xk, (N, DIM), jnp.float32) * 0.5
    pe = 0.1 * jax.random.normal(pek, (N, DIM), jnp.float32)
    batch_win_inds = jnp.zeros((N,), jnp.int32)   # unused by the forward pass

    out = scatter_attention_forward(params, x, offsets, counts,
                                    batch_win_inds, pe=pe)
    out = jax.block_until_ready(out)

    ref = reference_forward(params, x, offsets, counts, pe=pe)
    # bf16 streamed activations + single-pass (DEFAULT) MXU matmuls -> loosened
    # tolerance; LayerNorm statistics are exact f32 so this is dominated by the
    # same bf16 rounding the Triton/torch path sees under TF32-off anyway.
    np.testing.assert_allclose(np.asarray(out), ref, rtol=2e-2, atol=2e-2)
    print("KERNEL_OK")
</pallas_src>

<mosaic_0001>
module attributes {stable_mosaic.version = 11 : i64} {
  func.func @_qkv_proj_pe_kernel(%arg0: i32, %arg1: memref<1024x64xf32, #tpu.memory_space<vmem>>, %arg2: memref<1024x64xf32, #tpu.memory_space<vmem>>, %arg3: memref<64x256xf32, #tpu.memory_space<vmem>>, %arg4: memref<1x256xf32, #tpu.memory_space<vmem>>, %arg5: memref<1024x128xbf16, #tpu.memory_space<vmem>>, %arg6: memref<1024x128xbf16, #tpu.memory_space<vmem>>) attributes {dimension_semantics = [#tpu.dimension_semantics<parallel>], iteration_bounds = array<i64: 1>, scalar_prefetch = 0 : i64, scratch_operands = 0 : i64, tpu.core_type = #tpu.core_type<tc>, window_params = [{transform_indices = @transform_0, window_bounds = array<i64: 1024, 64>}, {transform_indices = @transform_1, window_bounds = array<i64: 1024, 64>}, {pipeline_mode = #tpu.pipeline_mode<synchronous>, transform_indices = @transform_2, window_bounds = array<i64: 64, 256>}, {pipeline_mode = #tpu.pipeline_mode<synchronous>, transform_indices = @transform_3, window_bounds = array<i64: 1, 256>}, {transform_indices = @transform_4, window_bounds = array<i64: 1024, 128>}, {transform_indices = @transform_5, window_bounds = array<i64: 1024, 128>}]} {
    %c0 = arith.constant 0 : index
    %c0_0 = arith.constant 0 : index
    %0 = vector.load %arg1[%c0, %c0_0] : memref<1024x64xf32, #tpu.memory_space<vmem>>, vector<1024x64xf32>
    %c0_1 = arith.constant 0 : index
    %c0_2 = arith.constant 0 : index
    %1 = vector.load %arg3[%c0_1, %c0_2] : memref<64x256xf32, #tpu.memory_space<vmem>>, vector<64x256xf32>
    %cst = arith.constant dense<0.000000e+00> : vector<1024x256xf32>
    %2 = tpu.matmul %0, %1, %cst {dimension_numbers = #tpu.dot_dimension_numbers<[1], [0], [0], [1], [0, 0, 1, 1], [], []>} : vector<1024x64xf32>, vector<64x256xf32>, vector<1024x256xf32> -> vector<1024x256xf32>
    %c0_3 = arith.constant 0 : index
    %c0_4 = arith.constant 0 : index
    %3 = vector.load %arg4[%c0_3, %c0_4] : memref<1x256xf32, #tpu.memory_space<vmem>>, vector<1x256xf32>
    %4 = vector.broadcast %3 : vector<1x256xf32> to vector<1024x256xf32>
    %5 = arith.addf %2, %4 : vector<1024x256xf32>
    %c0_5 = arith.constant 0 : index
    %c0_6 = arith.constant 0 : index
    %6 = vector.load %arg2[%c0_5, %c0_6] : memref<1024x64xf32, #tpu.memory_space<vmem>>, vector<1024x64xf32>
    %cst_7 = arith.constant 0.000000e+00 : f32
    %7 = vector.broadcast %cst_7 : f32 to vector<1024x64xf32>
    %8 = tpu.concatenate %6, %7 in 1 : vector<1024x64xf32>, vector<1024x64xf32> -> vector<1024x128xf32>
    %9 = vector.extract_strided_slice %5 {offsets = [0, 0], sizes = [1024, 128], strides = [1, 1]} : vector<1024x256xf32> to vector<1024x128xf32>
    %10 = arith.addf %9, %8 : vector<1024x128xf32>
    %11 = arith.truncf %10 : vector<1024x128xf32> to vector<1024x128xbf16>
    %c0_8 = arith.constant 0 : index
    %c0_9 = arith.constant 0 : index
    %12 = vector.load %arg5[%c0_8, %c0_9] : memref<1024x128xbf16, #tpu.memory_space<vmem>>, vector<1024x128xbf16>
    tpu.vector_store %arg5[%c0_8, %c0_9], %11 {strides = array<i32>} : memref<1024x128xbf16, #tpu.memory_space<vmem>>, vector<1024x128xbf16>,
    %13 = vector.extract_strided_slice %5 {offsets = [0, 128], sizes = [1024, 128], strides = [1, 1]} : vector<1024x256xf32> to vector<1024x128xf32>
    %14 = arith.addf %13, %8 : vector<1024x128xf32>
    %15 = arith.truncf %14 : vector<1024x128xf32> to vector<1024x128xbf16>
    %c0_10 = arith.constant 0 : index
    %c0_11 = arith.constant 0 : index
    %16 = vector.load %arg6[%c0_10, %c0_11] : memref<1024x128xbf16, #tpu.memory_space<vmem>>, vector<1024x128xbf16>
    tpu.vector_store %arg6[%c0_10, %c0_11], %15 {strides = array<i32>} : memref<1024x128xbf16, #tpu.memory_space<vmem>>, vector<1024x128xbf16>,
    return
  }
  func.func @transform_0(%arg0: i32) -> (i32, i32) {
    %c0_i32 = arith.constant 0 : i32
    %c0_i32_0 = arith.constant 0 : i32
    return %arg0, %c0_i32 : i32, i32
  }
  func.func @transform_1(%arg0: i32) -> (i32, i32) {
    %c0_i32 = arith.constant 0 : i32
    %c0_i32_0 = arith.constant 0 : i32
    return %arg0, %c0_i32 : i32, i32
  }
  func.func @transform_2(%arg0: i32) -> (i32, i32) {
    %c0_i32 = arith.constant 0 : i32
    %c0_i32_0 = arith.constant 0 : i32
    %c0_i32_1 = arith.constant 0 : i32
    return %c0_i32, %c0_i32_0 : i32, i32
  }
  func.func @transform_3(%arg0: i32) -> (i32, i32) {
    %c0_i32 = arith.constant 0 : i32
    %c0_i32_0 = arith.constant 0 : i32
    %c0_i32_1 = arith.constant 0 : i32
    return %c0_i32, %c0_i32_0 : i32, i32
  }
  func.func @transform_4(%arg0: i32) -> (i32, i32) {
    %c0_i32 = arith.constant 0 : i32
    %c0_i32_0 = arith.constant 0 : i32
    return %arg0, %c0_i32 : i32, i32
  }
  func.func @transform_5(%arg0: i32) -> (i32, i32) {
    %c0_i32 = arith.constant 0 : i32
    %c0_i32_0 = arith.constant 0 : i32
    return %arg0, %c0_i32 : i32, i32
  }
}

</mosaic_0001>

<llo_original>
// kernel: tpu_custom_call.1
$region0: #{tpu_custom_call.1}
  #allocation0 [shape = 'u32[]', space=smem, size = 0x4, offset = 0x4, fixed_abs, tag = 'smem constant byte address 0x4 - core index']
  #allocation1 [shape = 'u32[144,128]{1,0:T(1,128)}', space=vmem, size = 0x12000, scoped, tag = 'internal scratch']
  %s0 = inlined_call_operand.vmem [shape: f32[1024,64], index: 0, kind: input, shape index: {}]
  %s1 = inlined_call_operand.vmem [shape: f32[1024,64], index: 1, kind: input, shape index: {}]
  %s2 = inlined_call_operand.vmem [shape: f32[64,256], index: 2, kind: input, shape index: {}]
  %s3 = inlined_call_operand.vmem [shape: f32[1,256], index: 3, kind: input, shape index: {}]
  %s4 = inlined_call_operand.hbm [shape: bf16[1024,128], index: 4, kind: output, shape index: {0}]
  %s5 = inlined_call_operand.hbm [shape: bf16[1024,128], index: 5, kind: output, shape index: {1}]
  %6 = xla_tuple %s4, %s5
  %s7 = sld [smem:[#allocation0]]
  $region34: #{tpu_custom_call.1} parent=0
    _
  %s9 = ssub.s32 1, %s7
  %s10 = scalar_select 0, %s9, %s7
  $region1: #{tpu_custom_call.1} parent=0
    #allocation2 [shape = 'u8[262144]{0}', space=vmem, size = 0x40000, scoped, tag = 'output window, operand 0, single buffered']
    #allocation3 [shape = 's32[1]{0}', space=sflag, size = 0x4, scoped, tag = 'scoped memory for tpu_custom_call.1']
    #allocation4 [shape = 'u8[262144]{0}', space=vmem, size = 0x40000, scoped, tag = 'output window, operand 1, single buffered']
    #allocation5 [shape = 's32[1]{0}', space=sflag, size = 0x4, scoped, tag = 'scoped memory for tpu_custom_call.1']
    %11 = vsyncpa [#allocation3], 0
    %12 = vsyncpa [#allocation5], 0
    // Predicated region
    $region2: #{tpu_custom_call.1} parent=1 // pred_check
      _
    $region3: #{tpu_custom_call.1} parent=1 // pred_check_branch
      %14 = sbr.rel (0) target = $region5
    $region4: #{tpu_custom_call.1} parent=1 // pred_region
      _
    $region5: #{tpu_custom_call.1} parent=1 // pred_fallthru
      _
    // Predicated region
    $region6: #{tpu_custom_call.1} parent=1 // pred_check
      _
    $region7: #{tpu_custom_call.1} parent=1 // pred_check_branch
      %16 = sbr.rel (0) target = $region9
    $region8: #{tpu_custom_call.1} parent=1 // pred_region
      _
    $region9: #{tpu_custom_call.1} parent=1 // pred_fallthru
      _
    // Predicated region
    $region10: #{tpu_custom_call.1} parent=1 // pred_check
      _
    $region11: #{tpu_custom_call.1} parent=1 // pred_check_branch
      %18 = sbr.rel (0) target = $region13
    $region12: #{tpu_custom_call.1} parent=1 // pred_region
      _
    $region13: #{tpu_custom_call.1} parent=1 // pred_fallthru
      _
    // Predicated region
    $region14: #{tpu_custom_call.1} parent=1 // pred_check
      _
    $region15: #{tpu_custom_call.1} parent=1 // pred_check_branch
      %20 = sbr.rel (0) target = $region17
    $region16: #{tpu_custom_call.1} parent=1 // pred_region
      _
    $region17: #{tpu_custom_call.1} parent=1 // pred_fallthru
      _
    %v21 = vld [vmem:[%s0] sm:$0xff]
    %v22 = vld [vmem:[%s0 + $0x8] sm:$0xff]
    %v23 = vld [vmem:[%s0 + $0x10] sm:$0xff]
    %v24 = vld [vmem:[%s0 + $0x18] sm:$0xff]
    %v25 = vld [vmem:[%s0 + $0x20] sm:$0xff]
    %v26 = vld [vmem:[%s0 + $0x28] sm:$0xff]
    %v27 = vld [vmem:[%s0 + $0x30] sm:$0xff]
    %v28 = vld [vmem:[%s0 + $0x38] sm:$0xff]
    %v29 = vld [vmem:[%s0 + $0x40] sm:$0xff]
    %v30 = vld [vmem:[%s0 + $0x48] sm:$0xff]
    %v31 = vld [vmem:[%s0 + $0x50] sm:$0xff]
    %v32 = vld [vmem:[%s0 + $0x58] sm:$0xff]
    %v33 = vld [vmem:[%s0 + $0x60] sm:$0xff]
    %v34 = vld [vmem:[%s0 + $0x68] sm:$0xff]
    %v35 = vld [vmem:[%s0 + $0x70] sm:$0xff]
    %v36 = vld [vmem:[%s0 + $0x78] sm:$0xff]
    %v37 = vld [vmem:[%s0 + $0x80] sm:$0xff]
    %v38 = vld [vmem:[%s0 + $0x88] sm:$0xff]
    %v39 = vld [vmem:[%s0 + $0x90] sm:$0xff]
    %v40 = vld [vmem:[%s0 + $0x98] sm:$0xff]
    %v41 = vld [vmem:[%s0 + $0xa0] sm:$0xff]
    %v42 = vld [vmem:[%s0 + $0xa8] sm:$0xff]
    %v43 = vld [vmem:[%s0 + $0xb0] sm:$0xff]
    %v44 = vld [vmem:[%s0 + $0xb8] sm:$0xff]
    %v45 = vld [vmem:[%s0 + $0xc0] sm:$0xff]
    %v46 = vld [vmem:[%s0 + $0xc8] sm:$0xff]
    %v47 = vld [vmem:[%s0 + $0xd0] sm:$0xff]
    %v48 = vld [vmem:[%s0 + $0xd8] sm:$0xff]
    %v49 = vld [vmem:[%s0 + $0xe0] sm:$0xff]
    %v50 = vld [vmem:[%s0 + $0xe8] sm:$0xff]
    %v51 = vld [vmem:[%s0 + $0xf0] sm:$0xff]
    %v52 = vld [vmem:[%s0 + $0xf8] sm:$0xff]
    %v53 = vld [vmem:[%s0 + $0x100] sm:$0xff]
    %v54 = vld [vmem:[%s0 + $0x108] sm:$0xff]
    %v55 = vld [vmem:[%s0 + $0x110] sm:$0xff]
    %v56 = vld [vmem:[%s0 + $0x118] sm:$0xff]
    %v57 = vld [vmem:[%s0 + $0x120] sm:$0xff]
    %v58 = vld [vmem:[%s0 + $0x128] sm:$0xff]
    %v59 = vld [vmem:[%s0 + $0x130] sm:$0xff]
    %v60 = vld [vmem:[%s0 + $0x138] sm:$0xff]
    %v61 = vld [vmem:[%s0 + $0x140] sm:$0xff]
    %v62 = vld [vmem:[%s0 + $0x148] sm:$0xff]
    %v63 = vld [vmem:[%s0 + $0x150] sm:$0xff]
    %v64 = vld [vmem:[%s0 + $0x158] sm:$0xff]
    %v65 = vld [vmem:[%s0 + $0x160] sm:$0xff]
    %v66 = vld [vmem:[%s0 + $0x168] sm:$0xff]
    %v67 = vld [vmem:[%s0 + $0x170] sm:$0xff]
    %v68 = vld [vmem:[%s0 + $0x178] sm:$0xff]
    %v69 = vld [vmem:[%s0 + $0x180] sm:$0xff]
    %v70 = vld [vmem:[%s0 + $0x188] sm:$0xff]
    %v71 = vld [vmem:[%s0 + $0x190] sm:$0xff]
    %v72 = vld [vmem:[%s0 + $0x198] sm:$0xff]
    %v73 = vld [vmem:[%s0 + $0x1a0] sm:$0xff]
    %v74 = vld [vmem:[%s0 + $0x1a8] sm:$0xff]
    %v75 = vld [vmem:[%s0 + $0x1b0] sm:$0xff]
    %v76 = vld [vmem:[%s0 + $0x1b8] sm:$0xff]
    %v77 = vld [vmem:[%s0 + $0x1c0] sm:$0xff]
    %v78 = vld [vmem:[%s0 + $0x1c8] sm:$0xff]
    %v79 = vld [vmem:[%s0 + $0x1d0] sm:$0xff]
    %v80 = vld [vmem:[%s0 + $0x1d8] sm:$0xff]
    %v81 = vld [vmem:[%s0 + $0x1e0] sm:$0xff]
    %v82 = vld [vmem:[%s0 + $0x1e8] sm:$0xff]
    %v83 = vld [vmem:[%s0 + $0x1f0] sm:$0xff]
    %v84 = vld [vmem:[%s0 + $0x1f8] sm:$0xff]
    %v85 = vld [vmem:[%s0 + $0x200] sm:$0xff]
    %v86 = vld [vmem:[%s0 + $0x208] sm:$0xff]
    %v87 = vld [vmem:[%s0 + $0x210] sm:$0xff]
    %v88 = vld [vmem:[%s0 + $0x218] sm:$0xff]
    %v89 = vld [vmem:[%s0 + $0x220] sm:$0xff]
    %v90 = vld [vmem:[%s0 + $0x228] sm:$0xff]
    %v91 = vld [vmem:[%s0 + $0x230] sm:$0xff]
    %v92 = vld [vmem:[%s0 + $0x238] sm:$0xff]
    %v93 = vld [vmem:[%s0 + $0x240] sm:$0xff]
    %v94 = vld [vmem:[%s0 + $0x248] sm:$0xff]
    %v95 = vld [vmem:[%s0 + $0x250] sm:$0xff]
    %v96 = vld [vmem:[%s0 + $0x258] sm:$0xff]
    %v97 = vld [vmem:[%s0 + $0x260] sm:$0xff]
    %v98 = vld [vmem:[%s0 + $0x268] sm:$0xff]
    %v99 = vld [vmem:[%s0 + $0x270] sm:$0xff]
    %v100 = vld [vmem:[%s0 + $0x278] sm:$0xff]
    %v101 = vld [vmem:[%s0 + $0x280] sm:$0xff]
    %v102 = vld [vmem:[%s0 + $0x288] sm:$0xff]
    %v103 = vld [vmem:[%s0 + $0x290] sm:$0xff]
    %v104 = vld [vmem:[%s0 + $0x298] sm:$0xff]
    %v105 = vld [vmem:[%s0 + $0x2a0] sm:$0xff]
    %v106 = vld [vmem:[%s0 + $0x2a8] sm:$0xff]
    %v107 = vld [vmem:[%s0 + $0x2b0] sm:$0xff]
    %v108 = vld [vmem:[%s0 + $0x2b8] sm:$0xff]
    %v109 = vld [vmem:[%s0 + $0x2c0] sm:$0xff]
    %v110 = vld [vmem:[%s0 + $0x2c8] sm:$0xff]
    %v111 = vld [vmem:[%s0 + $0x2d0] sm:$0xff]
    %v112 = vld [vmem:[%s0 + $0x2d8] sm:$0xff]
    %v113 = vld [vmem:[%s0 + $0x2e0] sm:$0xff]
    %v114 = vld [vmem:[%s0 + $0x2e8] sm:$0xff]
    %v115 = vld [vmem:[%s0 + $0x2f0] sm:$0xff]
    %v116 = vld [vmem:[%s0 + $0x2f8] sm:$0xff]
    %v117 = vld [vmem:[%s0 + $0x300] sm:$0xff]
    %v118 = vld [vmem:[%s0 + $0x308] sm:$0xff]
    %v119 = vld [vmem:[%s0 + $0x310] sm:$0xff]
    %v120 = vld [vmem:[%s0 + $0x318] sm:$0xff]
    %v121 = vld [vmem:[%s0 + $0x320] sm:$0xff]
    %v122 = vld [vmem:[%s0 + $0x328] sm:$0xff]
    %v123 = vld [vmem:[%s0 + $0x330] sm:$0xff]
    %v124 = vld [vmem:[%s0 + $0x338] sm:$0xff]
    %v125 = vld [vmem:[%s0 + $0x340] sm:$0xff]
    %v126 = vld [vmem:[%s0 + $0x348] sm:$0xff]
    %v127 = vld [vmem:[%s0 + $0x350] sm:$0xff]
    %v128 = vld [vmem:[%s0 + $0x358] sm:$0xff]
    %v129 = vld [vmem:[%s0 + $0x360] sm:$0xff]
    %v130 = vld [vmem:[%s0 + $0x368] sm:$0xff]
    %v131 = vld [vmem:[%s0 + $0x370] sm:$0xff]
    %v132 = vld [vmem:[%s0 + $0x378] sm:$0xff]
    %v133 = vld [vmem:[%s0 + $0x380] sm:$0xff]
    %v134 = vld [vmem:[%s0 + $0x388] sm:$0xff]
    %v135 = vld [vmem:[%s0 + $0x390] sm:$0xff]
    %v136 = vld [vmem:[%s0 + $0x398] sm:$0xff]
    %v137 = vld [vmem:[%s0 + $0x3a0] sm:$0xff]
    %v138 = vld [vmem:[%s0 + $0x3a8] sm:$0xff]
    %v139 = vld [vmem:[%s0 + $0x3b0] sm:$0xff]
    %v140 = vld [vmem:[%s0 + $0x3b8] sm:$0xff]
    %v141 = vld [vmem:[%s0 + $0x3c0] sm:$0xff]
    %v142 = vld [vmem:[%s0 + $0x3c8] sm:$0xff]
    %v143 = vld [vmem:[%s0 + $0x3d0] sm:$0xff]
    %v144 = vld [vmem:[%s0 + $0x3d8] sm:$0xff]
    %v145 = vld [vmem:[%s0 + $0x3e0] sm:$0xff]
    %v146 = vld [vmem:[%s0 + $0x3e8] sm:$0xff]
    %v147 = vld [vmem:[%s0 + $0x3f0] sm:$0xff]
    %v148 = vld [vmem:[%s0 + $0x3f8] sm:$0xff]
    %v149 = vld [vmem:[%s2] sm:$0xff]
    %v150 = vld [vmem:[%s2 + $0x8] sm:$0xff]
    %v151 = vld [vmem:[%s2 + $0x10] sm:$0xff]
    %v152 = vld [vmem:[%s2 + $0x18] sm:$0xff]
    %v153 = vld [vmem:[%s2 + $0x20] sm:$0xff]
    %v154 = vld [vmem:[%s2 + $0x28] sm:$0xff]
    %v155 = vld [vmem:[%s2 + $0x30] sm:$0xff]
    %v156 = vld [vmem:[%s2 + $0x38] sm:$0xff]
    %v157 = vld [vmem:[%s2 + $0x40] sm:$0xff]
    %v158 = vld [vmem:[%s2 + $0x48] sm:$0xff]
    %v159 = vld [vmem:[%s2 + $0x50] sm:$0xff]
    %v160 = vld [vmem:[%s2 + $0x58] sm:$0xff]
    %v161 = vld [vmem:[%s2 + $0x60] sm:$0xff]
    %v162 = vld [vmem:[%s2 + $0x68] sm:$0xff]
    %v163 = vld [vmem:[%s2 + $0x70] sm:$0xff]
    %v164 = vld [vmem:[%s2 + $0x78] sm:$0xff]
    %v165 = vld [vmem:[%s3] sm:$0x3]
    %v167 = vlaneseq
    %v168 = vshrl.u32 %v167, 7
    %v169 = vsub.s32 0, %v168
    %v170 = vrot.slane %v165, %v169
    %v171 = vlaneseq
    %v172 = vshrl.u32 %v171, 7
    %v173 = vsub.s32 1, %v172
    %v174 = vrot.slane %v165, %v173
    %vm177 = vcmask 523264
    %v179 = vsel %vm177, %v21, 0
    %v182 = vsel %vm177, %v22, 0
    %v185 = vsel %vm177, %v23, 0
    %v188 = vsel %vm177, %v24, 0
    %v191 = vsel %vm177, %v25, 0
    %v194 = vsel %vm177, %v26, 0
    %v197 = vsel %vm177, %v27, 0
    %v200 = vsel %vm177, %v28, 0
    %v203 = vsel %vm177, %v29, 0
    %v206 = vsel %vm177, %v30, 0
    %v209 = vsel %vm177, %v31, 0
    %v212 = vsel %vm177, %v32, 0
    %v215 = vsel %vm177, %v33, 0
    %v218 = vsel %vm177, %v34, 0
    %v221 = vsel %vm177, %v35, 0
    %v224 = vsel %vm177, %v36, 0
    %v227 = vsel %vm177, %v37, 0
    %v230 = vsel %vm177, %v38, 0
    %v233 = vsel %vm177, %v39, 0
    %v236 = vsel %vm177, %v40, 0
    %v239 = vsel %vm177, %v41, 0
    %v242 = vsel %vm177, %v42, 0
    %v245 = vsel %vm177, %v43, 0
    %v248 = vsel %vm177, %v44, 0
    %v251 = vsel %vm177, %v45, 0
    %v254 = vsel %vm177, %v46, 0
    %v257 = vsel %vm177, %v47, 0
    %v260 = vsel %vm177, %v48, 0
    %v263 = vsel %vm177, %v49, 0
    %v266 = vsel %vm177, %v50, 0
    %v269 = vsel %vm177, %v51, 0
    %v272 = vsel %vm177, %v52, 0
    %v275 = vsel %vm177, %v53, 0
    %v278 = vsel %vm177, %v54, 0
    %v281 = vsel %vm177, %v55, 0
    %v284 = vsel %vm177, %v56, 0
    %v287 = vsel %vm177, %v57, 0
    %v290 = vsel %vm177, %v58, 0
    %v293 = vsel %vm177, %v59, 0
    %v296 = vsel %vm177, %v60, 0
    %v299 = vsel %vm177, %v61, 0
    %v302 = vsel %vm177, %v62, 0
    %v305 = vsel %vm177, %v63, 0
    %v308 = vsel %vm177, %v64, 0
    %v311 = vsel %vm177, %v65, 0
    %v314 = vsel %vm177, %v66, 0
    %v317 = vsel %vm177, %v67, 0
    %v320 = vsel %vm177, %v68, 0
    %v323 = vsel %vm177, %v69, 0
    %v326 = vsel %vm177, %v70, 0
    %v329 = vsel %vm177, %v71, 0
    %v332 = vsel %vm177, %v72, 0
    %v335 = vsel %vm177, %v73, 0
    %v338 = vsel %vm177, %v74, 0
    %v341 = vsel %vm177, %v75, 0
    %v344 = vsel %vm177, %v76, 0
    %v347 = vsel %vm177, %v77, 0
    %v350 = vsel %vm177, %v78, 0
    %v353 = vsel %vm177, %v79, 0
    %v356 = vsel %vm177, %v80, 0
    %v359 = vsel %vm177, %v81, 0
    %v362 = vsel %vm177, %v82, 0
    %v365 = vsel %vm177, %v83, 0
    %v368 = vsel %vm177, %v84, 0
    %v371 = vsel %vm177, %v85, 0
    %v374 = vsel %vm177, %v86, 0
    %v377 = vsel %vm177, %v87, 0
    %v380 = vsel %vm177, %v88, 0
    %v383 = vsel %vm177, %v89, 0
    %v386 = vsel %vm177, %v90, 0
    %v389 = vsel %vm177, %v91, 0
    %v392 = vsel %vm177, %v92, 0
    %v395 = vsel %vm177, %v93, 0
    %v398 = vsel %vm177, %v94, 0
    %v401 = vsel %vm177, %v95, 0
    %v404 = vsel %vm177, %v96, 0
    %v407 = vsel %vm177, %v97, 0
    %v410 = vsel %vm177, %v98, 0
    %v413 = vsel %vm177, %v99, 0
    %v416 = vsel %vm177, %v100, 0
    %v419 = vsel %vm177, %v101, 0
    %v422 = vsel %vm177, %v102, 0
    %v425 = vsel %vm177, %v103, 0
    %v428 = vsel %vm177, %v104, 0
    %v431 = vsel %vm177, %v105, 0
    %v434 = vsel %vm177, %v106, 0
    %v437 = vsel %vm177, %v107, 0
    %v440 = vsel %vm177, %v108, 0
    %v443 = vsel %vm177, %v109, 0
    %v446 = vsel %vm177, %v110, 0
    %v449 = vsel %vm177, %v111, 0
    %v452 = vsel %vm177, %v112, 0
    %v455 = vsel %vm177, %v113, 0
    %v458 = vsel %vm177, %v114, 0
    %v461 = vsel %vm177, %v115, 0
    %v464 = vsel %vm177, %v116, 0
    %v467 = vsel %vm177, %v117, 0
    %v470 = vsel %vm177, %v118, 0
    %v473 = vsel %vm177, %v119, 0
    %v476 = vsel %vm177, %v120, 0
    %v479 = vsel %vm177, %v121, 0
    %v482 = vsel %vm177, %v122, 0
    %v485 = vsel %vm177, %v123, 0
    %v488 = vsel %vm177, %v124, 0
    %v491 = vsel %vm177, %v125, 0
    %v494 = vsel %vm177, %v126, 0
    %v497 = vsel %vm177, %v127, 0
    %v500 = vsel %vm177, %v128, 0
    %v503 = vsel %vm177, %v129, 0
    %v506 = vsel %vm177, %v130, 0
    %v509 = vsel %vm177, %v131, 0
    %v512 = vsel %vm177, %v132, 0
    %v515 = vsel %vm177, %v133, 0
    %v518 = vsel %vm177, %v134, 0
    %v521 = vsel %vm177, %v135, 0
    %v524 = vsel %vm177, %v136, 0
    %v527 = vsel %vm177, %v137, 0
    %v530 = vsel %vm177, %v138, 0
    %v533 = vsel %vm177, %v139, 0
    %v536 = vsel %vm177, %v140, 0
    %v539 = vsel %vm177, %v141, 0
    %v542 = vsel %vm177, %v142, 0
    %v545 = vsel %vm177, %v143, 0
    %v548 = vsel %vm177, %v144, 0
    %v551 = vsel %vm177, %v145, 0
    %v554 = vsel %vm177, %v146, 0
    %v557 = vsel %vm177, %v147, 0
    %v560 = vsel %vm177, %v148, 0
    %562 = vmatprep.subr.mxu0 %v150
    %563 = vmatpush1.msra.mxu0 %v149
    %564 = vmatprep.subr.mxu0 %v152
    %565 = vmatpush1.msra.mxu0 %v151
    %566 = vmatprep.subr.mxu0 %v154
    %567 = vmatpush1.msra.mxu0 %v153
    %568 = vmatprep.subr.mxu0 %v156
    %569 = vmatpush1.msra.mxu0 %v155
    %570 = vmatprep.subr.mxu0 %v158
    %571 = vmatpush1.msra.mxu0 %v157
    %572 = vmatprep.subr.mxu0 %v160
    %573 = vmatpush1.msra.mxu0 %v159
    %574 = vmatprep.subr.mxu0 %v162
    %575 = vmatpush1.msra.mxu0 %v161
    %576 = vmatprep.subr.mxu0 %v164
    %577 = vmatpush1.msra.mxu0 %v163
    %578 = vmatprep.subr.mxu0 0.0
    %579 = vmatpush1.msra.mxu0 0.0
    %580 = vmatprep.subr.mxu0 0.0
    %581 = vmatpush1.msra.mxu0 0.0
    %582 = vmatprep.subr.mxu0 0.0
    %583 = vmatpush1.msra.mxu0 0.0
    %584 = vmatprep.subr.mxu0 0.0
    %585 = vmatpush1.msra.mxu0 0.0
    %586 = vmatprep.subr.mxu0 0.0
    %587 = vmatpush1.msra.mxu0 0.0
    %588 = vmatprep.subr.mxu0 0.0
    %589 = vmatpush1.msra.mxu0 0.0
    %590 = vmatprep.subr.mxu0 0.0
    %591 = vmatpush1.msra.mxu0 0.0
    %592 = vmatprep.subr.mxu0 0.0
    %593 = vmatpush1.msra.mxu0 0.0
    %594 = vmatprep.subr.mxu0 0.0
    %595 = vmatpush1.msra.mxu0 0.0
    %596 = vmatprep.subr.mxu0 0.0
    %597 = vmatpush1.msra.mxu0 0.0
    %598 = vmatprep.subr.mxu0 0.0
    %599 = vmatpush1.msra.mxu0 0.0
    %600 = vmatprep.subr.mxu0 0.0
    %601 = vmatpush1.msra.mxu0 0.0
    %602 = vmatprep.subr.mxu0 0.0
    %603 = vmatpush1.msra.mxu0 0.0
    %604 = vmatprep.subr.mxu0 0.0
    %605 = vmatpush1.msra.mxu0 0.0
    %606 = vmatprep.subr.mxu0 0.0
    %607 = vmatpush1.msra.mxu0 0.0
    %608 = vmatprep.subr.mxu0 0.0
    %609 = vmatpush1.msra.mxu0 0.0
    %610 = vmatprep.subr.mxu0 0.0
    %611 = vmatpush1.msra.mxu0 0.0
    %612 = vmatprep.subr.mxu0 0.0
    %613 = vmatpush1.msra.mxu0 0.0
    %614 = vmatprep.subr.mxu0 0.0
    %615 = vmatpush1.msra.mxu0 0.0
    %616 = vmatprep.subr.mxu0 0.0
    %617 = vmatpush1.msra.mxu0 0.0
    %618 = vmatprep.subr.mxu0 0.0
    %619 = vmatpush1.msra.mxu0 0.0
    %620 = vmatprep.subr.mxu0 0.0
    %621 = vmatpush1.msra.mxu0 0.0
    %622 = vmatprep.subr.mxu0 0.0
    %623 = vmatpush1.msra.mxu0 0.0
    %624 = vmatprep.subr.mxu0 0.0
    %625 = vmatpush1.msra.mxu0 0.0
    %626 = vmatprep.mubr.f32.mxu0 0.0
    %627 = vmatmul.mubr.f32.gmra.mrb[0].mxu0 %v179
    %v628 = vpop.f32.mrb[0].mxu0
    %v629 = vadd.f32 %v170, %v628
    %v630 = vpop.f32.mrb[0].mxu0
    %v631 = vadd.f32 %v174, %v630
    %632 = vmatprep.mubr.f32.mxu0 0.0
    %633 = vmatmul.mubr.f32.gmra.mrb[0].mxu0 %v182
    %v634 = vpop.f32.mrb[0].mxu0
    %v635 = vadd.f32 %v170, %v634
    %v636 = vpop.f32.mrb[0].mxu0
    %v637 = vadd.f32 %v174, %v636
    %638 = vmatprep.mubr.f32.mxu0 0.0
    %639 = vmatmul.mubr.f32.gmra.mrb[0].mxu0 %v185
    %v640 = vpop.f32.mrb[0].mxu0
    %v641 = vadd.f32 %v170, %v640
    %v642 = vpop.f32.mrb[0].mxu0
    %v643 = vadd.f32 %v174, %v642
    %644 = vmatprep.mubr.f32.mxu0 0.0
    %645 = vmatmul.mubr.f32.gmra.mrb[0].mxu0 %v188
    %v646 = vpop.f32.mrb[0].mxu0
    %v647 = vadd.f32 %v170, %v646
    %v648 = vpop.f32.mrb[0].mxu0
    %v649 = vadd.f32 %v174, %v648
    %650 = vmatprep.mubr.f32.mxu0 0.0
    %651 = vmatmul.mubr.f32.gmra.mrb[0].mxu0 %v191
    %v652 = vpop.f32.mrb[0].mxu0
    %v653 = vadd.f32 %v170, %v652
    %v654 = vpop.f32.mrb[0].mxu0
    %v655 = vadd.f32 %v174, %v654
    %656 = vmatprep.mubr.f32.mxu0 0.0
    %657 = vmatmul.mubr.f32.gmra.mrb[0].mxu0 %v194
    %v658 = vpop.f32.mrb[0].mxu0
    %v659 = vadd.f32 %v170, %v658
    %v660 = vpop.f32.mrb[0].mxu0
    %v661 = vadd.f32 %v174, %v660
    %662 = vmatprep.mubr.f32.mxu0 0.0
    %663 = vmatmul.mubr.f32.gmra.mrb[0].mxu0 %v197
    %v664 = vpop.f32.mrb[0].mxu0
    %v665 = vadd.f32 %v170, %v664
    %v666 = vpop.f32.mrb[0].mxu0
    %v667 = vadd.f32 %v174, %v666
    %668 = vmatprep.mubr.f32.mxu0 0.0
    %669 = vmatmul.mubr.f32.gmra.mrb[0].mxu0 %v200
    %v670 = vpop.f32.mrb[0].mxu0
    %v671 = vadd.f32 %v170, %v670
    %v672 = vpop.f32.mrb[0].mxu0
    %v673 = vadd.f32 %v174, %v672
    %674 = vmatprep.mubr.f32.mxu0 0.0
    %675 = vmatmul.mubr.f32.gmra.mrb[0].mxu0 %v203
    %v676 = vpop.f32.mrb[0].mxu0
    %v677 = vadd.f32 %v170, %v676
    %v678 = vpop.f32.mrb[0].mxu0
    %v679 = vadd.f32 %v174, %v678
    %680 = vmatprep.mubr.f32.mxu0 0.0
    %681 = vmatmul.mubr.f32.gmra.mrb[0].mxu0 %v206
    %v682 = vpop.f32.mrb[0].mxu0
    %v683 = vadd.f32 %v170, %v682
    %v684 = vpop.f32.mrb[0].mxu0
    %v685 = vadd.f32 %v174, %v684
    %686 = vmatprep.mubr.f32.mxu0 0.0
    %687 = vmatmul.mubr.f32.gmra.mrb[0].mxu0 %v209
    %v688 = vpop.f32.mrb[0].mxu0
    %v689 = vadd.f32 %v170, %v688
    %v690 = vpop.f32.mrb[0].mxu0
    %v691 = vadd.f32 %v174, %v690
    %692 = vmatprep.mubr.f32.mxu0 0.0
    %693 = vmatmul.mubr.f32.gmra.mrb[0].mxu0 %v212
    %v694 = vpop.f32.mrb[0].mxu0
    %v695 = vadd.f32 %v170, %v694
    %v696 = vpop.f32.mrb[0].mxu0
    %v697 = vadd.f32 %v174, %v696
    %698 = vmatprep.mubr.f32.mxu0 0.0
    %699 = vmatmul.mubr.f32.gmra.mrb[0].mxu0 %v215
    %v700 = vpop.f32.mrb[0].mxu0
    %v701 = vadd.f32 %v170, %v700
    %v702 = vpop.f32.mrb[0].mxu0
    %v703 = vadd.f32 %v174, %v702
    %704 = vmatprep.mubr.f32.mxu0 0.0
    %705 = vmatmul.mubr.f32.gmra.mrb[0].mxu0 %v218
    %v706 = vpop.f32.mrb[0].mxu0
    %v707 = vadd.f32 %v170, %v706
    %v708 = vpop.f32.mrb[0].mxu0
    %v709 = vadd.f32 %v174, %v708
    %710 = vmatprep.mubr.f32.mxu0 0.0
    %711 = vmatmul.mubr.f32.gmra.mrb[0].mxu0 %v221
    %v712 = vpop.f32.mrb[0].mxu0
    %v713 = vadd.f32 %v170, %v712
    %v714 = vpop.f32.mrb[0].mxu0
    %v715 = vadd.f32 %v174, %v714
    %716 = vmatprep.mubr.f32.mxu0 0.0
    %717 = vmatmul.mubr.f32.gmra.mrb[0].mxu0 %v224
    %v718 = vpop.f32.mrb[0].mxu0
    %v719 = vadd.f32 %v170, %v718
    %v720 = vpop.f32.mrb[0].mxu0
    %v721 = vadd.f32 %v174, %v720
    %722 = vmatprep.mubr.f32.mxu0 0.0
    %723 = vmatmul.mubr.f32.gmra.mrb[0].mxu0 %v227
    %v724 = vpop.f32.mrb[0].mxu0
    %v725 = vadd.f32 %v170, %v724
    %v726 = vpop.f32.mrb[0].mxu0
    %v727 = vadd.f32 %v174, %v726
    %728 = vmatprep.mubr.f32.mxu0 0.0
    %729 = vmatmul.mubr.f32.gmra.mrb[0].mxu0 %v230
    %v730 = vpop.f32.mrb[0].mxu0
    %v731 = vadd.f32 %v170, %v730
    %v732 = vpop.f32.mrb[0].mxu0
    %v733 = vadd.f32 %v174, %v732
    %734 = vmatprep.mubr.f32.mxu0 0.0
    %735 = vmatmul.mubr.f32.gmra.mrb[0].mxu0 %v233
    %v736 = vpop.f32.mrb[0].mxu0
    %v737 = vadd.f32 %v170, %v736
    %v738 = vpop.f32.mrb[0].mxu0
    %v739 = vadd.f32 %v174, %v738
    %740 = vmatprep.mubr.f32.mxu0 0.0
    %741 = vmatmul.mubr.f32.gmra.mrb[0].mxu0 %v236
    %v742 = vpop.f32.mrb[0].mxu0
    %v743 = vadd.f32 %v170, %v742
    %v744 = vpop.f32.mrb[0].mxu0
    %v745 = vadd.f32 %v174, %v744
    %746 = vmatprep.mubr.f32.mxu0 0.0
    %747 = vmatmul.mubr.f32.gmra.mrb[0].mxu0 %v239
    %v748 = vpop.f32.mrb[0].mxu0
    %v749 = vadd.f32 %v170, %v748
    %v750 = vpop.f32.mrb[0].mxu0
    %v751 = vadd.f32 %v174, %v750
    %752 = vmatprep.mubr.f32.mxu0 0.0
    %753 = vmatmul.mubr.f32.gmra.mrb[0].mxu0 %v242
    %v754 = vpop.f32.mrb[0].mxu0
    %v755 = vadd.f32 %v170, %v754
    %v756 = vpop.f32.mrb[0].mxu0
    %v757 = vadd.f32 %v174, %v756
    %758 = vmatprep.mubr.f32.mxu0 0.0
    %759 = vmatmul.mubr.f32.gmra.mrb[0].mxu0 %v245
    %v760 = vpop.f32.mrb[0].mxu0
    %v761 = vadd.f32 %v170, %v760
    %v762 = vpop.f32.mrb[0].mxu0
    %v763 = vadd.f32 %v174, %v762
    %764 = vmatprep.mubr.f32.mxu0 0.0
    %765 = vmatmul.mubr.f32.gmra.mrb[0].mxu0 %v248
    %v766 = vpop.f32.mrb[0].mxu0
    %v767 = vadd.f32 %v170, %v766
    %v768 = vpop.f32.mrb[0].mxu0
    %v769 = vadd.f32 %v174, %v768
    %770 = vmatprep.mubr.f32.mxu0 0.0
    %771 = vmatmul.mubr.f32.gmra.mrb[0].mxu0 %v251
    %v772 = vpop.f32.mrb[0].mxu0
    %v773 = vadd.f32 %v170, %v772
    %v774 = vpop.f32.mrb[0].mxu0
    %v775 = vadd.f32 %v174, %v774
    %776 = vmatprep.mubr.f32.mxu0 0.0
    %777 = vmatmul.mubr.f32.gmra.mrb[0].mxu0 %v254
    %v778 = vpop.f32.mrb[0].mxu0
    %v779 = vadd.f32 %v170, %v778
    %v780 = vpop.f32.mrb[0].mxu0
    %v781 = vadd.f32 %v174, %v780
    %782 = vmatprep.mubr.f32.mxu0 0.0
    %783 = vmatmul.mubr.f32.gmra.mrb[0].mxu0 %v257
    %v784 = vpop.f32.mrb[0].mxu0
    %v785 = vadd.f32 %v170, %v784
    %v786 = vpop.f32.mrb[0].mxu0
    %v787 = vadd.f32 %v174, %v786
    %788 = vmatprep.mubr.f32.mxu0 0.0
    %789 = vmatmul.mubr.f32.gmra.mrb[0].mxu0 %v260
    %v790 = vpop.f32.mrb[0].mxu0
    %v791 = vadd.f32 %v170, %v790
    %v792 = vpop.f32.mrb[0].mxu0
    %v793 = vadd.f32 %v174, %v792
    %794 = vmatprep.mubr.f32.mxu0 0.0
    %795 = vmatmul.mubr.f32.gmra.mrb[0].mxu0 %v263
    %v796 = vpop.f32.mrb[0].mxu0
    %v797 = vadd.f32 %v170, %v796
    %v798 = vpop.f32.mrb[0].mxu0
    %v799 = vadd.f32 %v174, %v798
    %800 = vmatprep.mubr.f32.mxu0 0.0
    %801 = vmatmul.mubr.f32.gmra.mrb[0].mxu0 %v266
    %v802 = vpop.f32.mrb[0].mxu0
    %v803 = vadd.f32 %v170, %v802
    %v804 = vpop.f32.mrb[0].mxu0
    %v805 = vadd.f32 %v174, %v804
    %806 = vmatprep.mubr.f32.mxu0 0.0
    %807 = vmatmul.mubr.f32.gmra.mrb[0].mxu0 %v269
    %v808 = vpop.f32.mrb[0].mxu0
    %v809 = vadd.f32 %v170, %v808
    %v810 = vpop.f32.mrb[0].mxu0
    %v811 = vadd.f32 %v174, %v810
    %812 = vmatprep.mubr.f32.mxu0 0.0
    %813 = vmatmul.mubr.f32.gmra.mrb[0].mxu0 %v272
    %v814 = vpop.f32.mrb[0].mxu0
    %v815 = vadd.f32 %v170, %v814
    %v816 = vpop.f32.mrb[0].mxu0
    %v817 = vadd.f32 %v174, %v816
    %818 = vmatprep.mubr.f32.mxu0 0.0
    %819 = vmatmul.mubr.f32.gmra.mrb[0].mxu0 %v275
    %v820 = vpop.f32.mrb[0].mxu0
    %v821 = vadd.f32 %v170, %v820
    %v822 = vpop.f32.mrb[0].mxu0
    %v823 = vadd.f32 %v174, %v822
    %824 = vmatprep.mubr.f32.mxu0 0.0
    %825 = vmatmul.mubr.f32.gmra.mrb[0].mxu0 %v278
    %v826 = vpop.f32.mrb[0].mxu0
    %v827 = vadd.f32 %v170, %v826
    %v828 = vpop.f32.mrb[0].mxu0
    %v829 = vadd.f32 %v174, %v828
    %830 = vmatprep.mubr.f32.mxu0 0.0
    %831 = vmatmul.mubr.f32.gmra.mrb[0].mxu0 %v281
    %v832 = vpop.f32.mrb[0].mxu0
    %v833 = vadd.f32 %v170, %v832
    %v834 = vpop.f32.mrb[0].mxu0
    %v835 = vadd.f32 %v174, %v834
    %836 = vmatprep.mubr.f32.mxu0 0.0
    %837 = vmatmul.mubr.f32.gmra.mrb[0].mxu0 %v284
    %v838 = vpop.f32.mrb[0].mxu0
    %v839 = vadd.f32 %v170, %v838
    %v840 = vpop.f32.mrb[0].mxu0
    %v841 = vadd.f32 %v174, %v840
    %842 = vmatprep.mubr.f32.mxu0 0.0
    %843 = vmatmul.mubr.f32.gmra.mrb[0].mxu0 %v287
    %v844 = vpop.f32.mrb[0].mxu0
    %v845 = vadd.f32 %v170, %v844
    %v846 = vpop.f32.mrb[0].mxu0
    %v847 = vadd.f32 %v174, %v846
    %848 = vmatprep.mubr.f32.mxu0 0.0
    %849 = vmatmul.mubr.f32.gmra.mrb[0].mxu0 %v290
    %v850 = vpop.f32.mrb[0].mxu0
    %v851 = vadd.f32 %v170, %v850
    %v852 = vpop.f32.mrb[0].mxu0
    %v853 = vadd.f32 %v174, %v852
    %854 = vmatprep.mubr.f32.mxu0 0.0
    %855 = vmatmul.mubr.f32.gmra.mrb[0].mxu0 %v293
    %v856 = vpop.f32.mrb[0].mxu0
    %v857 = vadd.f32 %v170, %v856
    %v858 = vpop.f32.mrb[0].mxu0
    %v859 = vadd.f32 %v174, %v858
    %860 = vmatprep.mubr.f32.mxu0 0.0
    %861 = vmatmul.mubr.f32.gmra.mrb[0].mxu0 %v296
    %v862 = vpop.f32.mrb[0].mxu0
    %v863 = vadd.f32 %v170, %v862
    %v864 = vpop.f32.mrb[0].mxu0
    %v865 = vadd.f32 %v174, %v864
    %866 = vmatprep.mubr.f32.mxu0 0.0
    %867 = vmatmul.mubr.f32.gmra.mrb[0].mxu0 %v299
    %v868 = vpop.f32.mrb[0].mxu0
    %v869 = vadd.f32 %v170, %v868
    %v870 = vpop.f32.mrb[0].mxu0
    %v871 = vadd.f32 %v174, %v870
    %872 = vmatprep.mubr.f32.mxu0 0.0
    %873 = vmatmul.mubr.f32.gmra.mrb[0].mxu0 %v302
    %v874 = vpop.f32.mrb[0].mxu0
    %v875 = vadd.f32 %v170, %v874
    %v876 = vpop.f32.mrb[0].mxu0
    %v877 = vadd.f32 %v174, %v876
    %878 = vmatprep.mubr.f32.mxu0 0.0
    %879 = vmatmul.mubr.f32.gmra.mrb[0].mxu0 %v305
    %v880 = vpop.f32.mrb[0].mxu0
    %v881 = vadd.f32 %v170, %v880
    %v882 = vpop.f32.mrb[0].mxu0
    %v883 = vadd.f32 %v174, %v882
    %884 = vmatprep.mubr.f32.mxu0 0.0
    %885 = vmatmul.mubr.f32.gmra.mrb[0].mxu0 %v308
    %v886 = vpop.f32.mrb[0].mxu0
    %v887 = vadd.f32 %v170, %v886
    %v888 = vpop.f32.mrb[0].mxu0
    %v889 = vadd.f32 %v174, %v888
    %890 = vmatprep.mubr.f32.mxu0 0.0
    %891 = vmatmul.mubr.f32.gmra.mrb[0].mxu0 %v311
    %v892 = vpop.f32.mrb[0].mxu0
    %v893 = vadd.f32 %v170, %v892
    %v894 = vpop.f32.mrb[0].mxu0
    %v895 = vadd.f32 %v174, %v894
    %896 = vmatprep.mubr.f32.mxu0 0.0
    %897 = vmatmul.mubr.f32.gmra.mrb[0].mxu0 %v314
    %v898 = vpop.f32.mrb[0].mxu0
    %v899 = vadd.f32 %v170, %v898
    %v900 = vpop.f32.mrb[0].mxu0
    %v901 = vadd.f32 %v174, %v900
    %902 = vmatprep.mubr.f32.mxu0 0.0
    %903 = vmatmul.mubr.f32.gmra.mrb[0].mxu0 %v317
    %v904 = vpop.f32.mrb[0].mxu0
    %v905 = vadd.f32 %v170, %v904
    %v906 = vpop.f32.mrb[0].mxu0
    %v907 = vadd.f32 %v174, %v906
    %908 = vmatprep.mubr.f32.mxu0 0.0
    %909 = vmatmul.mubr.f32.gmra.mrb[0].mxu0 %v320
    %v910 = vpop.f32.mrb[0].mxu0
    %v911 = vadd.f32 %v170, %v910
    %v912 = vpop.f32.mrb[0].mxu0
    %v913 = vadd.f32 %v174, %v912
    %914 = vmatprep.mubr.f32.mxu0 0.0
    %915 = vmatmul.mubr.f32.gmra.mrb[0].mxu0 %v323
    %v916 = vpop.f32.mrb[0].mxu0
    %v917 = vadd.f32 %v170, %v916
    %v918 = vpop.f32.mrb[0].mxu0
    %v919 = vadd.f32 %v174, %v918
    %920 = vmatprep.mubr.f32.mxu0 0.0
    %921 = vmatmul.mubr.f32.gmra.mrb[0].mxu0 %v326
    %v922 = vpop.f32.mrb[0].mxu0
    %v923 = vadd.f32 %v170, %v922
    %v924 = vpop.f32.mrb[0].mxu0
    %v925 = vadd.f32 %v174, %v924
    %926 = vmatprep.mubr.f32.mxu0 0.0
    %927 = vmatmul.mubr.f32.gmra.mrb[0].mxu0 %v329
    %v928 = vpop.f32.mrb[0].mxu0
    %v929 = vadd.f32 %v170, %v928
    %v930 = vpop.f32.mrb[0].mxu0
    %v931 = vadd.f32 %v174, %v930
    %932 = vmatprep.mubr.f32.mxu0 0.0
    %933 = vmatmul.mubr.f32.gmra.mrb[0].mxu0 %v332
    %v934 = vpop.f32.mrb[0].mxu0
    %v935 = vadd.f32 %v170, %v934
    %v936 = vpop.f32.mrb[0].mxu0
    %v937 = vadd.f32 %v174, %v936
    %938 = vmatprep.mubr.f32.mxu0 0.0
    %939 = vmatmul.mubr.f32.gmra.mrb[0].mxu0 %v335
    %v940 = vpop.f32.mrb[0].mxu0
    %v941 = vadd.f32 %v170, %v940
    %v942 = vpop.f32.mrb[0].mxu0
    %v943 = vadd.f32 %v174, %v942
    %944 = vmatprep.mubr.f32.mxu0 0.0
    %945 = vmatmul.mubr.f32.gmra.mrb[0].mxu0 %v338
    %v946 = vpop.f32.mrb[0].mxu0
    %v947 = vadd.f32 %v170, %v946
    %v948 = vpop.f32.mrb[0].mxu0
    %v949 = vadd.f32 %v174, %v948
    %950 = vmatprep.mubr.f32.mxu0 0.0
    %951 = vmatmul.mubr.f32.gmra.mrb[0].mxu0 %v341
    %v952 = vpop.f32.mrb[0].mxu0
    %v953 = vadd.f32 %v170, %v952
    %v954 = vpop.f32.mrb[0].mxu0
    %v955 = vadd.f32 %v174, %v954
    %956 = vmatprep.mubr.f32.mxu0 0.0
    %957 = vmatmul.mubr.f32.gmra.mrb[0].mxu0 %v344
    %v958 = vpop.f32.mrb[0].mxu0
    %v959 = vadd.f32 %v170, %v958
    %v960 = vpop.f32.mrb[0].mxu0
    %v961 = vadd.f32 %v174, %v960
    %962 = vmatprep.mubr.f32.mxu0 0.0
    %963 = vmatmul.mubr.f32.gmra.mrb[0].mxu0 %v347
    %v964 = vpop.f32.mrb[0].mxu0
    %v965 = vadd.f32 %v170, %v964
    %v966 = vpop.f32.mrb[0].mxu0
    %v967 = vadd.f32 %v174, %v966
    %968 = vmatprep.mubr.f32.mxu0 0.0
    %969 = vmatmul.mubr.f32.gmra.mrb[0].mxu0 %v350
    %v970 = vpop.f32.mrb[0].mxu0
    %v971 = vadd.f32 %v170, %v970
    %v972 = vpop.f32.mrb[0].mxu0
    %v973 = vadd.f32 %v174, %v972
    %974 = vmatprep.mubr.f32.mxu0 0.0
    %975 = vmatmul.mubr.f32.gmra.mrb[0].mxu0 %v353
    %v976 = vpop.f32.mrb[0].mxu0
    %v977 = vadd.f32 %v170, %v976
    %v978 = vpop.f32.mrb[0].mxu0
    %v979 = vadd.f32 %v174, %v978
    %980 = vmatprep.mubr.f32.mxu0 0.0
    %981 = vmatmul.mubr.f32.gmra.mrb[0].mxu0 %v356
    %v982 = vpop.f32.mrb[0].mxu0
    %v983 = vadd.f32 %v170, %v982
    %v984 = vpop.f32.mrb[0].mxu0
    %v985 = vadd.f32 %v174, %v984
    %986 = vmatprep.mubr.f32.mxu0 0.0
    %987 = vmatmul.mubr.f32.gmra.mrb[0].mxu0 %v359
    %v988 = vpop.f32.mrb[0].mxu0
    %v989 = vadd.f32 %v170, %v988
    %v990 = vpop.f32.mrb[0].mxu0
    %v991 = vadd.f32 %v174, %v990
    %992 = vmatprep.mubr.f32.mxu0 0.0
    %993 = vmatmul.mubr.f32.gmra.mrb[0].mxu0 %v362
    %v994 = vpop.f32.mrb[0].mxu0
    %v995 = vadd.f32 %v170, %v994
    %v996 = vpop.f32.mrb[0].mxu0
    %v997 = vadd.f32 %v174, %v996
    %998 = vmatprep.mubr.f32.mxu0 0.0
    %999 = vmatmul.mubr.f32.gmra.mrb[0].mxu0 %v365
    %v1000 = vpop.f32.mrb[0].mxu0
    %v1001 = vadd.f32 %v170, %v1000
    %v1002 = vpop.f32.mrb[0].mxu0
    %v1003 = vadd.f32 %v174, %v1002
    %1004 = vmatprep.mubr.f32.mxu0 0.0
    %1005 = vmatmul.mubr.f32.gmra.mrb[0].mxu0 %v368
    %v1006 = vpop.f32.mrb[0].mxu0
    %v1007 = vadd.f32 %v170, %v1006
    %v1008 = vpop.f32.mrb[0].mxu0
    %v1009 = vadd.f32 %v174, %v1008
    %1010 = vmatprep.mubr.f32.mxu0 0.0
    %1011 = vmatmul.mubr.f32.gmra.mrb[0].mxu0 %v371
    %v1012 = vpop.f32.mrb[0].mxu0
    %v1013 = vadd.f32 %v170, %v1012
    %v1014 = vpop.f32.mrb[0].mxu0
    %v1015 = vadd.f32 %v174, %v1014
    %1016 = vmatprep.mubr.f32.mxu0 0.0
    %1017 = vmatmul.mubr.f32.gmra.mrb[0].mxu0 %v374
    %v1018 = vpop.f32.mrb[0].mxu0
    %v1019 = vadd.f32 %v170, %v1018
    %v1020 = vpop.f32.mrb[0].mxu0
    %v1021 = vadd.f32 %v174, %v1020
    %1022 = vmatprep.mubr.f32.mxu0 0.0
    %1023 = vmatmul.mubr.f32.gmra.mrb[0].mxu0 %v377
    %v1024 = vpop.f32.mrb[0].mxu0
    %v1025 = vadd.f32 %v170, %v1024
    %v1026 = vpop.f32.mrb[0].mxu0
    %v1027 = vadd.f32 %v174, %v1026
    %1028 = vmatprep.mubr.f32.mxu0 0.0
    %1029 = vmatmul.mubr.f32.gmra.mrb[0].mxu0 %v380
    %v1030 = vpop.f32.mrb[0].mxu0
    %v1031 = vadd.f32 %v170, %v1030
    %v1032 = vpop.f32.mrb[0].mxu0
    %v1033 = vadd.f32 %v174, %v1032
    %1034 = vmatprep.mubr.f32.mxu0 0.0
    %1035 = vmatmul.mubr.f32.gmra.mrb[0].mxu0 %v383
    %v1036 = vpop.f32.mrb[0].mxu0
    %v1037 = vadd.f32 %v170, %v1036
    %v1038 = vpop.f32.mrb[0].mxu0
    %v1039 = vadd.f32 %v174, %v1038
    %1040 = vmatprep.mubr.f32.mxu0 0.0
    %1041 = vmatmul.mubr.f32.gmra.mrb[0].mxu0 %v386
    %v1042 = vpop.f32.mrb[0].mxu0
    %v1043 = vadd.f32 %v170, %v1042
    %v1044 = vpop.f32.mrb[0].mxu0
    %v1045 = vadd.f32 %v174, %v1044
    %1046 = vmatprep.mubr.f32.mxu0 0.0
    %1047 = vmatmul.mubr.f32.gmra.mrb[0].mxu0 %v389
    %v1048 = vpop.f32.mrb[0].mxu0
    %v1049 = vadd.f32 %v170, %v1048
    %v1050 = vpop.f32.mrb[0].mxu0
    %v1051 = vadd.f32 %v174, %v1050
    %1052 = vmatprep.mubr.f32.mxu0 0.0
    %1053 = vmatmul.mubr.f32.gmra.mrb[0].mxu0 %v392
    %v1054 = vpop.f32.mrb[0].mxu0
    %v1055 = vadd.f32 %v170, %v1054
    %v1056 = vpop.f32.mrb[0].mxu0
    %v1057 = vadd.f32 %v174, %v1056
    %1058 = vmatprep.mubr.f32.mxu0 0.0
    %1059 = vmatmul.mubr.f32.gmra.mrb[0].mxu0 %v395
    %v1060 = vpop.f32.mrb[0].mxu0
    %v1061 = vadd.f32 %v170, %v1060
    %v1062 = vpop.f32.mrb[0].mxu0
    %v1063 = vadd.f32 %v174, %v1062
    %1064 = vmatprep.mubr.f32.mxu0 0.0
    %1065 = vmatmul.mubr.f32.gmra.mrb[0].mxu0 %v398
    %v1066 = vpop.f32.mrb[0].mxu0
    %v1067 = vadd.f32 %v170, %v1066
    %v1068 = vpop.f32.mrb[0].mxu0
    %v1069 = vadd.f32 %v174, %v1068
    %1070 = vmatprep.mubr.f32.mxu0 0.0
    %1071 = vmatmul.mubr.f32.gmra.mrb[0].mxu0 %v401
    %v1072 = vpop.f32.mrb[0].mxu0
    %v1073 = vadd.f32 %v170, %v1072
    %v1074 = vpop.f32.mrb[0].mxu0
    %v1075 = vadd.f32 %v174, %v1074
    %1076 = vmatprep.mubr.f32.mxu0 0.0
    %1077 = vmatmul.mubr.f32.gmra.mrb[0].mxu0 %v404
    %v1078 = vpop.f32.mrb[0].mxu0
    %v1079 = vadd.f32 %v170, %v1078
    %v1080 = vpop.f32.mrb[0].mxu0
    %v1081 = vadd.f32 %v174, %v1080
    %1082 = vmatprep.mubr.f32.mxu0 0.0
    %1083 = vmatmul.mubr.f32.gmra.mrb[0].mxu0 %v407
    %v1084 = vpop.f32.mrb[0].mxu0
    %v1085 = vadd.f32 %v170, %v1084
    %v1086 = vpop.f32.mrb[0].mxu0
    %v1087 = vadd.f32 %v174, %v1086
    %1088 = vmatprep.mubr.f32.mxu0 0.0
    %1089 = vmatmul.mubr.f32.gmra.mrb[0].mxu0 %v410
    %v1090 = vpop.f32.mrb[0].mxu0
    %v1091 = vadd.f32 %v170, %v1090
    %v1092 = vpop.f32.mrb[0].mxu0
    %v1093 = vadd.f32 %v174, %v1092
    %1094 = vmatprep.mubr.f32.mxu0 0.0
    %1095 = vmatmul.mubr.f32.gmra.mrb[0].mxu0 %v413
    %v1096 = vpop.f32.mrb[0].mxu0
    %v1097 = vadd.f32 %v170, %v1096
    %v1098 = vpop.f32.mrb[0].mxu0
    %v1099 = vadd.f32 %v174, %v1098
    %1100 = vmatprep.mubr.f32.mxu0 0.0
    %1101 = vmatmul.mubr.f32.gmra.mrb[0].mxu0 %v416
    %v1102 = vpop.f32.mrb[0].mxu0
    %v1103 = vadd.f32 %v170, %v1102
    %v1104 = vpop.f32.mrb[0].mxu0
    %v1105 = vadd.f32 %v174, %v1104
    %1106 = vmatprep.mubr.f32.mxu0 0.0
    %1107 = vmatmul.mubr.f32.gmra.mrb[0].mxu0 %v419
    %v1108 = vpop.f32.mrb[0].mxu0
    %v1109 = vadd.f32 %v170, %v1108
    %v1110 = vpop.f32.mrb[0].mxu0
    %v1111 = vadd.f32 %v174, %v1110
    %1112 = vmatprep.mubr.f32.mxu0 0.0
    %1113 = vmatmul.mubr.f32.gmra.mrb[0].mxu0 %v422
    %v1114 = vpop.f32.mrb[0].mxu0
    %v1115 = vadd.f32 %v170, %v1114
    %v1116 = vpop.f32.mrb[0].mxu0
    %v1117 = vadd.f32 %v174, %v1116
    %1118 = vmatprep.mubr.f32.mxu0 0.0
    %1119 = vmatmul.mubr.f32.gmra.mrb[0].mxu0 %v425
    %v1120 = vpop.f32.mrb[0].mxu0
    %v1121 = vadd.f32 %v170, %v1120
    %v1122 = vpop.f32.mrb[0].mxu0
    %v1123 = vadd.f32 %v174, %v1122
    %1124 = vmatprep.mubr.f32.mxu0 0.0
    %1125 = vmatmul.mubr.f32.gmra.mrb[0].mxu0 %v428
    %v1126 = vpop.f32.mrb[0].mxu0
    %v1127 = vadd.f32 %v170, %v1126
    %v1128 = vpop.f32.mrb[0].mxu0
    %v1129 = vadd.f32 %v174, %v1128
    %1130 = vmatprep.mubr.f32.mxu0 0.0
    %1131 = vmatmul.mubr.f32.gmra.mrb[0].mxu0 %v431
    %v1132 = vpop.f32.mrb[0].mxu0
    %v1133 = vadd.f32 %v170, %v1132
    %v1134 = vpop.f32.mrb[0].mxu0
    %v1135 = vadd.f32 %v174, %v1134
    %1136 = vmatprep.mubr.f32.mxu0 0.0
    %1137 = vmatmul.mubr.f32.gmra.mrb[0].mxu0 %v434
    %v1138 = vpop.f32.mrb[0].mxu0
    %v1139 = vadd.f32 %v170, %v1138
    %v1140 = vpop.f32.mrb[0].mxu0
    %v1141 = vadd.f32 %v174, %v1140
    %1142 = vmatprep.mubr.f32.mxu0 0.0
    %1143 = vmatmul.mubr.f32.gmra.mrb[0].mxu0 %v437
    %v1144 = vpop.f32.mrb[0].mxu0
    %v1145 = vadd.f32 %v170, %v1144
    %v1146 = vpop.f32.mrb[0].mxu0
    %v1147 = vadd.f32 %v174, %v1146
    %1148 = vmatprep.mubr.f32.mxu0 0.0
    %1149 = vmatmul.mubr.f32.gmra.mrb[0].mxu0 %v440
    %v1150 = vpop.f32.mrb[0].mxu0
    %v1151 = vadd.f32 %v170, %v1150
    %v1152 = vpop.f32.mrb[0].mxu0
    %v1153 = vadd.f32 %v174, %v1152
    %1154 = vmatprep.mubr.f32.mxu0 0.0
    %1155 = vmatmul.mubr.f32.gmra.mrb[0].mxu0 %v443
    %v1156 = vpop.f32.mrb[0].mxu0
    %v1157 = vadd.f32 %v170, %v1156
    %v1158 = vpop.f32.mrb[0].mxu0
    %v1159 = vadd.f32 %v174, %v1158
    %1160 = vmatprep.mubr.f32.mxu0 0.0
    %1161 = vmatmul.mubr.f32.gmra.mrb[0].mxu0 %v446
    %v1162 = vpop.f32.mrb[0].mxu0
    %v1163 = vadd.f32 %v170, %v1162
    %v1164 = vpop.f32.mrb[0].mxu0
    %v1165 = vadd.f32 %v174, %v1164
    %1166 = vmatprep.mubr.f32.mxu0 0.0
    %1167 = vmatmul.mubr.f32.gmra.mrb[0].mxu0 %v449
    %v1168 = vpop.f32.mrb[0].mxu0
    %v1169 = vadd.f32 %v170, %v1168
    %v1170 = vpop.f32.mrb[0].mxu0
    %v1171 = vadd.f32 %v174, %v1170
    %1172 = vmatprep.mubr.f32.mxu0 0.0
    %1173 = vmatmul.mubr.f32.gmra.mrb[0].mxu0 %v452
    %v1174 = vpop.f32.mrb[0].mxu0
    %v1175 = vadd.f32 %v170, %v1174
    %v1176 = vpop.f32.mrb[0].mxu0
    %v1177 = vadd.f32 %v174, %v1176
    %1178 = vmatprep.mubr.f32.mxu0 0.0
    %1179 = vmatmul.mubr.f32.gmra.mrb[0].mxu0 %v455
    %v1180 = vpop.f32.mrb[0].mxu0
    %v1181 = vadd.f32 %v170, %v1180
    %v1182 = vpop.f32.mrb[0].mxu0
    %v1183 = vadd.f32 %v174, %v1182
    %1184 = vmatprep.mubr.f32.mxu0 0.0
    %1185 = vmatmul.mubr.f32.gmra.mrb[0].mxu0 %v458
    %v1186 = vpop.f32.mrb[0].mxu0
    %v1187 = vadd.f32 %v170, %v1186
    %v1188 = vpop.f32.mrb[0].mxu0
    %v1189 = vadd.f32 %v174, %v1188
    %1190 = vmatprep.mubr.f32.mxu0 0.0
    %1191 = vmatmul.mubr.f32.gmra.mrb[0].mxu0 %v461
    %v1192 = vpop.f32.mrb[0].mxu0
    %v1193 = vadd.f32 %v170, %v1192
    %v1194 = vpop.f32.mrb[0].mxu0
    %v1195 = vadd.f32 %v174, %v1194
    %1196 = vmatprep.mubr.f32.mxu0 0.0
    %1197 = vmatmul.mubr.f32.gmra.mrb[0].mxu0 %v464
    %v1198 = vpop.f32.mrb[0].mxu0
    %v1199 = vadd.f32 %v170, %v1198
    %v1200 = vpop.f32.mrb[0].mxu0
    %v1201 = vadd.f32 %v174, %v1200
    %1202 = vmatprep.mubr.f32.mxu0 0.0
    %1203 = vmatmul.mubr.f32.gmra.mrb[0].mxu0 %v467
    %v1204 = vpop.f32.mrb[0].mxu0
    %v1205 = vadd.f32 %v170, %v1204
    %v1206 = vpop.f32.mrb[0].mxu0
    %v1207 = vadd.f32 %v174, %v1206
    %1208 = vmatprep.mubr.f32.mxu0 0.0
    %1209 = vmatmul.mubr.f32.gmra.mrb[0].mxu0 %v470
    %v1210 = vpop.f32.mrb[0].mxu0
    %v1211 = vadd.f32 %v170, %v1210
    %v1212 = vpop.f32.mrb[0].mxu0
    %v1213 = vadd.f32 %v174, %v1212
    %1214 = vmatprep.mubr.f32.mxu0 0.0
    %1215 = vmatmul.mubr.f32.gmra.mrb[0].mxu0 %v473
    %v1216 = vpop.f32.mrb[0].mxu0
    %v1217 = vadd.f32 %v170, %v1216
    %v1218 = vpop.f32.mrb[0].mxu0
    %v1219 = vadd.f32 %v174, %v1218
    %1220 = vmatprep.mubr.f32.mxu0 0.0
    %1221 = vmatmul.mubr.f32.gmra.mrb[0].mxu0 %v476
    %v1222 = vpop.f32.mrb[0].mxu0
    %v1223 = vadd.f32 %v170, %v1222
    %v1224 = vpop.f32.mrb[0].mxu0
    %v1225 = vadd.f32 %v174, %v1224
    %1226 = vmatprep.mubr.f32.mxu0 0.0
    %1227 = vmatmul.mubr.f32.gmra.mrb[0].mxu0 %v479
    %v1228 = vpop.f32.mrb[0].mxu0
    %v1229 = vadd.f32 %v170, %v1228
    %v1230 = vpop.f32.mrb[0].mxu0
    %v1231 = vadd.f32 %v174, %v1230
    %1232 = vmatprep.mubr.f32.mxu0 0.0
    %1233 = vmatmul.mubr.f32.gmra.mrb[0].mxu0 %v482
    %v1234 = vpop.f32.mrb[0].mxu0
    %v1235 = vadd.f32 %v170, %v1234
    %v1236 = vpop.f32.mrb[0].mxu0
    %v1237 = vadd.f32 %v174, %v1236
    %1238 = vmatprep.mubr.f32.mxu0 0.0
    %1239 = vmatmul.mubr.f32.gmra.mrb[0].mxu0 %v485
    %v1240 = vpop.f32.mrb[0].mxu0
    %v1241 = vadd.f32 %v170, %v1240
    %v1242 = vpop.f32.mrb[0].mxu0
    %v1243 = vadd.f32 %v174, %v1242
    %1244 = vmatprep.mubr.f32.mxu0 0.0
    %1245 = vmatmul.mubr.f32.gmra.mrb[0].mxu0 %v488
    %v1246 = vpop.f32.mrb[0].mxu0
    %v1247 = vadd.f32 %v170, %v1246
    %v1248 = vpop.f32.mrb[0].mxu0
    %v1249 = vadd.f32 %v174, %v1248
    %1250 = vmatprep.mubr.f32.mxu0 0.0
    %1251 = vmatmul.mubr.f32.gmra.mrb[0].mxu0 %v491
    %v1252 = vpop.f32.mrb[0].mxu0
    %v1253 = vadd.f32 %v170, %v1252
    %v1254 = vpop.f32.mrb[0].mxu0
    %v1255 = vadd.f32 %v174, %v1254
    %1256 = vmatprep.mubr.f32.mxu0 0.0
    %1257 = vmatmul.mubr.f32.gmra.mrb[0].mxu0 %v494
    %v1258 = vpop.f32.mrb[0].mxu0
    %v1259 = vadd.f32 %v170, %v1258
    %v1260 = vpop.f32.mrb[0].mxu0
    %v1261 = vadd.f32 %v174, %v1260
    %1262 = vmatprep.mubr.f32.mxu0 0.0
    %1263 = vmatmul.mubr.f32.gmra.mrb[0].mxu0 %v497
    %v1264 = vpop.f32.mrb[0].mxu0
    %v1265 = vadd.f32 %v170, %v1264
    %v1266 = vpop.f32.mrb[0].mxu0
    %v1267 = vadd.f32 %v174, %v1266
    %1268 = vmatprep.mubr.f32.mxu0 0.0
    %1269 = vmatmul.mubr.f32.gmra.mrb[0].mxu0 %v500
    %v1270 = vpop.f32.mrb[0].mxu0
    %v1271 = vadd.f32 %v170, %v1270
    %v1272 = vpop.f32.mrb[0].mxu0
    %v1273 = vadd.f32 %v174, %v1272
    %1274 = vmatprep.mubr.f32.mxu0 0.0
    %1275 = vmatmul.mubr.f32.gmra.mrb[0].mxu0 %v503
    %v1276 = vpop.f32.mrb[0].mxu0
    %v1277 = vadd.f32 %v170, %v1276
    %v1278 = vpop.f32.mrb[0].mxu0
    %v1279 = vadd.f32 %v174, %v1278
    %1280 = vmatprep.mubr.f32.mxu0 0.0
    %1281 = vmatmul.mubr.f32.gmra.mrb[0].mxu0 %v506
    %v1282 = vpop.f32.mrb[0].mxu0
    %v1283 = vadd.f32 %v170, %v1282
    %v1284 = vpop.f32.mrb[0].mxu0
    %v1285 = vadd.f32 %v174, %v1284
    %1286 = vmatprep.mubr.f32.mxu0 0.0
    %1287 = vmatmul.mubr.f32.gmra.mrb[0].mxu0 %v509
    %v1288 = vpop.f32.mrb[0].mxu0
    %v1289 = vadd.f32 %v170, %v1288
    %v1290 = vpop.f32.mrb[0].mxu0
    %v1291 = vadd.f32 %v174, %v1290
    %1292 = vmatprep.mubr.f32.mxu0 0.0
    %1293 = vmatmul.mubr.f32.gmra.mrb[0].mxu0 %v512
    %v1294 = vpop.f32.mrb[0].mxu0
    %v1295 = vadd.f32 %v170, %v1294
    %v1296 = vpop.f32.mrb[0].mxu0
    %v1297 = vadd.f32 %v174, %v1296
    %1298 = vmatprep.mubr.f32.mxu0 0.0
    %1299 = vmatmul.mubr.f32.gmra.mrb[0].mxu0 %v515
    %v1300 = vpop.f32.mrb[0].mxu0
    %v1301 = vadd.f32 %v170, %v1300
    %v1302 = vpop.f32.mrb[0].mxu0
    %v1303 = vadd.f32 %v174, %v1302
    %1304 = vmatprep.mubr.f32.mxu0 0.0
    %1305 = vmatmul.mubr.f32.gmra.mrb[0].mxu0 %v518
    %v1306 = vpop.f32.mrb[0].mxu0
    %v1307 = vadd.f32 %v170, %v1306
    %v1308 = vpop.f32.mrb[0].mxu0
    %v1309 = vadd.f32 %v174, %v1308
    %1310 = vmatprep.mubr.f32.mxu0 0.0
    %1311 = vmatmul.mubr.f32.gmra.mrb[0].mxu0 %v521
    %v1312 = vpop.f32.mrb[0].mxu0
    %v1313 = vadd.f32 %v170, %v1312
    %v1314 = vpop.f32.mrb[0].mxu0
    %v1315 = vadd.f32 %v174, %v1314
    %1316 = vmatprep.mubr.f32.mxu0 0.0
    %1317 = vmatmul.mubr.f32.gmra.mrb[0].mxu0 %v524
    %v1318 = vpop.f32.mrb[0].mxu0
    %v1319 = vadd.f32 %v170, %v1318
    %v1320 = vpop.f32.mrb[0].mxu0
    %v1321 = vadd.f32 %v174, %v1320
    %1322 = vmatprep.mubr.f32.mxu0 0.0
    %1323 = vmatmul.mubr.f32.gmra.mrb[0].mxu0 %v527
    %v1324 = vpop.f32.mrb[0].mxu0
    %v1325 = vadd.f32 %v170, %v1324
    %v1326 = vpop.f32.mrb[0].mxu0
    %v1327 = vadd.f32 %v174, %v1326
    %1328 = vmatprep.mubr.f32.mxu0 0.0
    %1329 = vmatmul.mubr.f32.gmra.mrb[0].mxu0 %v530
    %v1330 = vpop.f32.mrb[0].mxu0
    %v1331 = vadd.f32 %v170, %v1330
    %v1332 = vpop.f32.mrb[0].mxu0
    %v1333 = vadd.f32 %v174, %v1332
    %1334 = vmatprep.mubr.f32.mxu0 0.0
    %1335 = vmatmul.mubr.f32.gmra.mrb[0].mxu0 %v533
    %v1336 = vpop.f32.mrb[0].mxu0
    %v1337 = vadd.f32 %v170, %v1336
    %v1338 = vpop.f32.mrb[0].mxu0
    %v1339 = vadd.f32 %v174, %v1338
    %1340 = vmatprep.mubr.f32.mxu0 0.0
    %1341 = vmatmul.mubr.f32.gmra.mrb[0].mxu0 %v536
    %v1342 = vpop.f32.mrb[0].mxu0
    %v1343 = vadd.f32 %v170, %v1342
    %v1344 = vpop.f32.mrb[0].mxu0
    %v1345 = vadd.f32 %v174, %v1344
    %1346 = vmatprep.mubr.f32.mxu0 0.0
    %1347 = vmatmul.mubr.f32.gmra.mrb[0].mxu0 %v539
    %v1348 = vpop.f32.mrb[0].mxu0
    %v1349 = vadd.f32 %v170, %v1348
    %v1350 = vpop.f32.mrb[0].mxu0
    %v1351 = vadd.f32 %v174, %v1350
    %1352 = vmatprep.mubr.f32.mxu0 0.0
    %1353 = vmatmul.mubr.f32.gmra.mrb[0].mxu0 %v542
    %v1354 = vpop.f32.mrb[0].mxu0
    %v1355 = vadd.f32 %v170, %v1354
    %v1356 = vpop.f32.mrb[0].mxu0
    %v1357 = vadd.f32 %v174, %v1356
    %1358 = vmatprep.mubr.f32.mxu0 0.0
    %1359 = vmatmul.mubr.f32.gmra.mrb[0].mxu0 %v545
    %v1360 = vpop.f32.mrb[0].mxu0
    %v1361 = vadd.f32 %v170, %v1360
    %v1362 = vpop.f32.mrb[0].mxu0
    %v1363 = vadd.f32 %v174, %v1362
    %1364 = vmatprep.mubr.f32.mxu0 0.0
    %1365 = vmatmul.mubr.f32.gmra.mrb[0].mxu0 %v548
    %v1366 = vpop.f32.mrb[0].mxu0
    %v1367 = vadd.f32 %v170, %v1366
    %v1368 = vpop.f32.mrb[0].mxu0
    %v1369 = vadd.f32 %v174, %v1368
    %1370 = vmatprep.mubr.f32.mxu0 0.0
    %1371 = vmatmul.mubr.f32.gmra.mrb[0].mxu0 %v551
    %v1372 = vpop.f32.mrb[0].mxu0
    %v1373 = vadd.f32 %v170, %v1372
    %v1374 = vpop.f32.mrb[0].mxu0
    %v1375 = vadd.f32 %v174, %v1374
    %1376 = vmatprep.mubr.f32.mxu0 0.0
    %1377 = vmatmul.mubr.f32.gmra.mrb[0].mxu0 %v554
    %v1378 = vpop.f32.mrb[0].mxu0
    %v1379 = vadd.f32 %v170, %v1378
    %v1380 = vpop.f32.mrb[0].mxu0
    %v1381 = vadd.f32 %v174, %v1380
    %1382 = vmatprep.mubr.f32.mxu0 0.0
    %1383 = vmatmul.mubr.f32.gmra.mrb[0].mxu0 %v557
    %v1384 = vpop.f32.mrb[0].mxu0
    %v1385 = vadd.f32 %v170, %v1384
    %v1386 = vpop.f32.mrb[0].mxu0
    %v1387 = vadd.f32 %v174, %v1386
    %1388 = vmatprep.mubr.f32.mxu0 0.0
    %1389 = vmatmul.mubr.f32.gmra.mrb[0].mxu0 %v560
    %v1390 = vpop.f32.mrb[0].mxu0
    %v1391 = vadd.f32 %v170, %v1390
    %v1392 = vpop.f32.mrb[0].mxu0
    %v1393 = vadd.f32 %v174, %v1392
    %1394 = vdwg.mxu0
    %v1395 = vld [vmem:[%s1] sm:$0xff]
    %v1396 = vld [vmem:[%s1 + $0x8] sm:$0xff]
    %v1397 = vld [vmem:[%s1 + $0x10] sm:$0xff]
    %v1398 = vld [vmem:[%s1 + $0x18] sm:$0xff]
    %v1399 = vld [vmem:[%s1 + $0x20] sm:$0xff]
    %v1400 = vld [vmem:[%s1 + $0x28] sm:$0xff]
    %v1401 = vld [vmem:[%s1 + $0x30] sm:$0xff]
    %v1402 = vld [vmem:[%s1 + $0x38] sm:$0xff]
    %v1403 = vld [vmem:[%s1 + $0x40] sm:$0xff]
    %v1404 = vld [vmem:[%s1 + $0x48] sm:$0xff]
    %v1405 = vld [vmem:[%s1 + $0x50] sm:$0xff]
    %v1406 = vld [vmem:[%s1 + $0x58] sm:$0xff]
    %v1407 = vld [vmem:[%s1 + $0x60] sm:$0xff]
    %v1408 = vld [vmem:[%s1 + $0x68] sm:$0xff]
    %v1409 = vld [vmem:[%s1 + $0x70] sm:$0xff]
    %v1410 = vld [vmem:[%s1 + $0x78] sm:$0xff]
    %v1411 = vld [vmem:[%s1 + $0x80] sm:$0xff]
    %v1412 = vld [vmem:[%s1 + $0x88] sm:$0xff]
    %v1413 = vld [vmem:[%s1 + $0x90] sm:$0xff]
    %v1414 = vld [vmem:[%s1 + $0x98] sm:$0xff]
    %v1415 = vld [vmem:[%s1 + $0xa0] sm:$0xff]
    %v1416 = vld [vmem:[%s1 + $0xa8] sm:$0xff]
    %v1417 = vld [vmem:[%s1 + $0xb0] sm:$0xff]
    %v1418 = vld [vmem:[%s1 + $0xb8] sm:$0xff]
    %v1419 = vld [vmem:[%s1 + $0xc0] sm:$0xff]
    %v1420 = vld [vmem:[%s1 + $0xc8] sm:$0xff]
    %v1421 = vld [vmem:[%s1 + $0xd0] sm:$0xff]
    %v1422 = vld [vmem:[%s1 + $0xd8] sm:$0xff]
    %v1423 = vld [vmem:[%s1 + $0xe0] sm:$0xff]
    %v1424 = vld [vmem:[%s1 + $0xe8] sm:$0xff]
    %v1425 = vld [vmem:[%s1 + $0xf0] sm:$0xff]
    %v1426 = vld [vmem:[%s1 + $0xf8] sm:$0xff]
    %v1427 = vld [vmem:[%s1 + $0x100] sm:$0xff]
    %v1428 = vld [vmem:[%s1 + $0x108] sm:$0xff]
    %v1429 = vld [vmem:[%s1 + $0x110] sm:$0xff]
    %v1430 = vld [vmem:[%s1 + $0x118] sm:$0xff]
    %v1431 = vld [vmem:[%s1 + $0x120] sm:$0xff]
    %v1432 = vld [vmem:[%s1 + $0x128] sm:$0xff]
    %v1433 = vld [vmem:[%s1 + $0x130] sm:$0xff]
    %v1434 = vld [vmem:[%s1 + $0x138] sm:$0xff]
    %v1435 = vld [vmem:[%s1 + $0x140] sm:$0xff]
    %v1436 = vld [vmem:[%s1 + $0x148] sm:$0xff]
    %v1437 = vld [vmem:[%s1 + $0x150] sm:$0xff]
    %v1438 = vld [vmem:[%s1 + $0x158] sm:$0xff]
    %v1439 = vld [vmem:[%s1 + $0x160] sm:$0xff]
    %v1440 = vld [vmem:[%s1 + $0x168] sm:$0xff]
    %v1441 = vld [vmem:[%s1 + $0x170] sm:$0xff]
    %v1442 = vld [vmem:[%s1 + $0x178] sm:$0xff]
    %v1443 = vld [vmem:[%s1 + $0x180] sm:$0xff]
    %v1444 = vld [vmem:[%s1 + $0x188] sm:$0xff]
    %v1445 = vld [vmem:[%s1 + $0x190] sm:$0xff]
    %v1446 = vld [vmem:[%s1 + $0x198] sm:$0xff]
    %v1447 = vld [vmem:[%s1 + $0x1a0] sm:$0xff]
    %v1448 = vld [vmem:[%s1 + $0x1a8] sm:$0xff]
    %v1449 = vld [vmem:[%s1 + $0x1b0] sm:$0xff]
    %v1450 = vld [vmem:[%s1 + $0x1b8] sm:$0xff]
    %v1451 = vld [vmem:[%s1 + $0x1c0] sm:$0xff]
    %v1452 = vld [vmem:[%s1 + $0x1c8] sm:$0xff]
    %v1453 = vld [vmem:[%s1 + $0x1d0] sm:$0xff]
    %v1454 = vld [vmem:[%s1 + $0x1d8] sm:$0xff]
    %v1455 = vld [vmem:[%s1 + $0x1e0] sm:$0xff]
    %v1456 = vld [vmem:[%s1 + $0x1e8] sm:$0xff]
    %v1457 = vld [vmem:[%s1 + $0x1f0] sm:$0xff]
    %v1458 = vld [vmem:[%s1 + $0x1f8] sm:$0xff]
    %v1459 = vld [vmem:[%s1 + $0x200] sm:$0xff]
    %v1460 = vld [vmem:[%s1 + $0x208] sm:$0xff]
    %v1461 = vld [vmem:[%s1 + $0x210] sm:$0xff]
    %v1462 = vld [vmem:[%s1 + $0x218] sm:$0xff]
    %v1463 = vld [vmem:[%s1 + $0x220] sm:$0xff]
    %v1464 = vld [vmem:[%s1 + $0x228] sm:$0xff]
    %v1465 = vld [vmem:[%s1 + $0x230] sm:$0xff]
    %v1466 = vld [vmem:[%s1 + $0x238] sm:$0xff]
    %v1467 = vld [vmem:[%s1 + $0x240] sm:$0xff]
    %v1468 = vld [vmem:[%s1 + $0x248] sm:$0xff]
    %v1469 = vld [vmem:[%s1 + $0x250] sm:$0xff]
    %v1470 = vld [vmem:[%s1 + $0x258] sm:$0xff]
    %v1471 = vld [vmem:[%s1 + $0x260] sm:$0xff]
    %v1472 = vld [vmem:[%s1 + $0x268] sm:$0xff]
    %v1473 = vld [vmem:[%s1 + $0x270] sm:$0xff]
    %v1474 = vld [vmem:[%s1 + $0x278] sm:$0xff]
    %v1475 = vld [vmem:[%s1 + $0x280] sm:$0xff]
    %v1476 = vld [vmem:[%s1 + $0x288] sm:$0xff]
    %v1477 = vld [vmem:[%s1 + $0x290] sm:$0xff]
    %v1478 = vld [vmem:[%s1 + $0x298] sm:$0xff]
    %v1479 = vld [vmem:[%s1 + $0x2a0] sm:$0xff]
    %v1480 = vld [vmem:[%s1 + $0x2a8] sm:$0xff]
    %v1481 = vld [vmem:[%s1 + $0x2b0] sm:$0xff]
    %v1482 = vld [vmem:[%s1 + $0x2b8] sm:$0xff]
    %v1483 = vld [vmem:[%s1 + $0x2c0] sm:$0xff]
    %v1484 = vld [vmem:[%s1 + $0x2c8] sm:$0xff]
    %v1485 = vld [vmem:[%s1 + $0x2d0] sm:$0xff]
    %v1486 = vld [vmem:[%s1 + $0x2d8] sm:$0xff]
    %v1487 = vld [vmem:[%s1 + $0x2e0] sm:$0xff]
    %v1488 = vld [vmem:[%s1 + $0x2e8] sm:$0xff]
    %v1489 = vld [vmem:[%s1 + $0x2f0] sm:$0xff]
    %v1490 = vld [vmem:[%s1 + $0x2f8] sm:$0xff]
    %v1491 = vld [vmem:[%s1 + $0x300] sm:$0xff]
    %v1492 = vld [vmem:[%s1 + $0x308] sm:$0xff]
    %v1493 = vld [vmem:[%s1 + $0x310] sm:$0xff]
    %v1494 = vld [vmem:[%s1 + $0x318] sm:$0xff]
    %v1495 = vld [vmem:[%s1 + $0x320] sm:$0xff]
    %v1496 = vld [vmem:[%s1 + $0x328] sm:$0xff]
    %v1497 = vld [vmem:[%s1 + $0x330] sm:$0xff]
    %v1498 = vld [vmem:[%s1 + $0x338] sm:$0xff]
    %v1499 = vld [vmem:[%s1 + $0x340] sm:$0xff]
    %v1500 = vld [vmem:[%s1 + $0x348] sm:$0xff]
    %v1501 = vld [vmem:[%s1 + $0x350] sm:$0xff]
    %v1502 = vld [vmem:[%s1 + $0x358] sm:$0xff]
    %v1503 = vld [vmem:[%s1 + $0x360] sm:$0xff]
    %v1504 = vld [vmem:[%s1 + $0x368] sm:$0xff]
    %v1505 = vld [vmem:[%s1 + $0x370] sm:$0xff]
    %v1506 = vld [vmem:[%s1 + $0x378] sm:$0xff]
    %v1507 = vld [vmem:[%s1 + $0x380] sm:$0xff]
    %v1508 = vld [vmem:[%s1 + $0x388] sm:$0xff]
    %v1509 = vld [vmem:[%s1 + $0x390] sm:$0xff]
    %v1510 = vld [vmem:[%s1 + $0x398] sm:$0xff]
    %v1511 = vld [vmem:[%s1 + $0x3a0] sm:$0xff]
    %v1512 = vld [vmem:[%s1 + $0x3a8] sm:$0xff]
    %v1513 = vld [vmem:[%s1 + $0x3b0] sm:$0xff]
    %v1514 = vld [vmem:[%s1 + $0x3b8] sm:$0xff]
    %v1515 = vld [vmem:[%s1 + $0x3c0] sm:$0xff]
    %v1516 = vld [vmem:[%s1 + $0x3c8] sm:$0xff]
    %v1517 = vld [vmem:[%s1 + $0x3d0] sm:$0xff]
    %v1518 = vld [vmem:[%s1 + $0x3d8] sm:$0xff]
    %v1519 = vld [vmem:[%s1 + $0x3e0] sm:$0xff]
    %v1520 = vld [vmem:[%s1 + $0x3e8] sm:$0xff]
    %v1521 = vld [vmem:[%s1 + $0x3f0] sm:$0xff]
    %v1522 = vld [vmem:[%s1 + $0x3f8] sm:$0xff]
    %v1523 = vsel %vm177, %v1395, 0.0
    %v1524 = vsel %vm177, %v1396, 0.0
    %v1525 = vsel %vm177, %v1397, 0.0
    %v1526 = vsel %vm177, %v1398, 0.0
    %v1527 = vsel %vm177, %v1399, 0.0
    %v1528 = vsel %vm177, %v1400, 0.0
    %v1529 = vsel %vm177, %v1401, 0.0
    %v1530 = vsel %vm177, %v1402, 0.0
    %v1531 = vsel %vm177, %v1403, 0.0
    %v1532 = vsel %vm177, %v1404, 0.0
    %v1533 = vsel %vm177, %v1405, 0.0
    %v1534 = vsel %vm177, %v1406, 0.0
    %v1535 = vsel %vm177, %v1407, 0.0
    %v1536 = vsel %vm177, %v1408, 0.0
    %v1537 = vsel %vm177, %v1409, 0.0
    %v1538 = vsel %vm177, %v1410, 0.0
    %v1539 = vsel %vm177, %v1411, 0.0
    %v1540 = vsel %vm177, %v1412, 0.0
    %v1541 = vsel %vm177, %v1413, 0.0
    %v1542 = vsel %vm177, %v1414, 0.0
    %v1543 = vsel %vm177, %v1415, 0.0
    %v1544 = vsel %vm177, %v1416, 0.0
    %v1545 = vsel %vm177, %v1417, 0.0
    %v1546 = vsel %vm177, %v1418, 0.0
    %v1547 = vsel %vm177, %v1419, 0.0
    %v1548 = vsel %vm177, %v1420, 0.0
    %v1549 = vsel %vm177, %v1421, 0.0
    %v1550 = vsel %vm177, %v1422, 0.0
    %v1551 = vsel %vm177, %v1423, 0.0
    %v1552 = vsel %vm177, %v1424, 0.0
    %v1553 = vsel %vm177, %v1425, 0.0
    %v1554 = vsel %vm177, %v1426, 0.0
    %v1555 = vsel %vm177, %v1427, 0.0
    %v1556 = vsel %vm177, %v1428, 0.0
    %v1557 = vsel %vm177, %v1429, 0.0
    %v1558 = vsel %vm177, %v1430, 0.0
    %v1559 = vsel %vm177, %v1431, 0.0
    %v1560 = vsel %vm177, %v1432, 0.0
    %v1561 = vsel %vm177, %v1433, 0.0
    %v1562 = vsel %vm177, %v1434, 0.0
    %v1563 = vsel %vm177, %v1435, 0.0
    %v1564 = vsel %vm177, %v1436, 0.0
    %v1565 = vsel %vm177, %v1437, 0.0
    %v1566 = vsel %vm177, %v1438, 0.0
    %v1567 = vsel %vm177, %v1439, 0.0
    %v1568 = vsel %vm177, %v1440, 0.0
    %v1569 = vsel %vm177, %v1441, 0.0
    %v1570 = vsel %vm177, %v1442, 0.0
    %v1571 = vsel %vm177, %v1443, 0.0
    %v1572 = vsel %vm177, %v1444, 0.0
    %v1573 = vsel %vm177, %v1445, 0.0
    %v1574 = vsel %vm177, %v1446, 0.0
    %v1575 = vsel %vm177, %v1447, 0.0
    %v1576 = vsel %vm177, %v1448, 0.0
    %v1577 = vsel %vm177, %v1449, 0.0
    %v1578 = vsel %vm177, %v1450, 0.0
    %v1579 = vsel %vm177, %v1451, 0.0
    %v1580 = vsel %vm177, %v1452, 0.0
    %v1581 = vsel %vm177, %v1453, 0.0
    %v1582 = vsel %vm177, %v1454, 0.0
    %v1583 = vsel %vm177, %v1455, 0.0
    %v1584 = vsel %vm177, %v1456, 0.0
    %v1585 = vsel %vm177, %v1457, 0.0
    %v1586 = vsel %vm177, %v1458, 0.0
    %v1587 = vsel %vm177, %v1459, 0.0
    %v1588 = vsel %vm177, %v1460, 0.0
    %v1589 = vsel %vm177, %v1461, 0.0
    %v1590 = vsel %vm177, %v1462, 0.0
    %v1591 = vsel %vm177, %v1463, 0.0
    %v1592 = vsel %vm177, %v1464, 0.0
    %v1593 = vsel %vm177, %v1465, 0.0
    %v1594 = vsel %vm177, %v1466, 0.0
    %v1595 = vsel %vm177, %v1467, 0.0
    %v1596 = vsel %vm177, %v1468, 0.0
    %v1597 = vsel %vm177, %v1469, 0.0
    %v1598 = vsel %vm177, %v1470, 0.0
    %v1599 = vsel %vm177, %v1471, 0.0
    %v1600 = vsel %vm177, %v1472, 0.0
    %v1601 = vsel %vm177, %v1473, 0.0
    %v1602 = vsel %vm177, %v1474, 0.0
    %v1603 = vsel %vm177, %v1475, 0.0
    %v1604 = vsel %vm177, %v1476, 0.0
    %v1605 = vsel %vm177, %v1477, 0.0
    %v1606 = vsel %vm177, %v1478, 0.0
    %v1607 = vsel %vm177, %v1479, 0.0
    %v1608 = vsel %vm177, %v1480, 0.0
    %v1609 = vsel %vm177, %v1481, 0.0
    %v1610 = vsel %vm177, %v1482, 0.0
    %v1611 = vsel %vm177, %v1483, 0.0
    %v1612 = vsel %vm177, %v1484, 0.0
    %v1613 = vsel %vm177, %v1485, 0.0
    %v1614 = vsel %vm177, %v1486, 0.0
    %v1615 = vsel %vm177, %v1487, 0.0
    %v1616 = vsel %vm177, %v1488, 0.0
    %v1617 = vsel %vm177, %v1489, 0.0
    %v1618 = vsel %vm177, %v1490, 0.0
    %v1619 = vsel %vm177, %v1491, 0.0
    %v1620 = vsel %vm177, %v1492, 0.0
    %v1621 = vsel %vm177, %v1493, 0.0
    %v1622 = vsel %vm177, %v1494, 0.0
    %v1623 = vsel %vm177, %v1495, 0.0
    %v1624 = vsel %vm177, %v1496, 0.0
    %v1625 = vsel %vm177, %v1497, 0.0
    %v1626 = vsel %vm177, %v1498, 0.0
    %v1627 = vsel %vm177, %v1499, 0.0
    %v1628 = vsel %vm177, %v1500, 0.0
    %v1629 = vsel %vm177, %v1501, 0.0
    %v1630 = vsel %vm177, %v1502, 0.0
    %v1631 = vsel %vm177, %v1503, 0.0
    %v1632 = vsel %vm177, %v1504, 0.0
    %v1633 = vsel %vm177, %v1505, 0.0
    %v1634 = vsel %vm177, %v1506, 0.0
    %v1635 = vsel %vm177, %v1507, 0.0
    %v1636 = vsel %vm177, %v1508, 0.0
    %v1637 = vsel %vm177, %v1509, 0.0
    %v1638 = vsel %vm177, %v1510, 0.0
    %v1639 = vsel %vm177, %v1511, 0.0
    %v1640 = vsel %vm177, %v1512, 0.0
    %v1641 = vsel %vm177, %v1513, 0.0
    %v1642 = vsel %vm177, %v1514, 0.0
    %v1643 = vsel %vm177, %v1515, 0.0
    %v1644 = vsel %vm177, %v1516, 0.0
    %v1645 = vsel %vm177, %v1517, 0.0
    %v1646 = vsel %vm177, %v1518, 0.0
    %v1647 = vsel %vm177, %v1519, 0.0
    %v1648 = vsel %vm177, %v1520, 0.0
    %v1649 = vsel %vm177, %v1521, 0.0
    %v1650 = vsel %vm177, %v1522, 0.0
    %v1651 = vadd.f32 %v629, %v1523
    %v1652 = vadd.f32 %v635, %v1524
    %v1653 = vadd.f32 %v641, %v1525
    %v1654 = vadd.f32 %v647, %v1526
    %v1655 = vadd.f32 %v653, %v1527
    %v1656 = vadd.f32 %v659, %v1528
    %v1657 = vadd.f32 %v665, %v1529
    %v1658 = vadd.f32 %v671, %v1530
    %v1659 = vadd.f32 %v677, %v1531
    %v1660 = vadd.f32 %v683, %v1532
    %v1661 = vadd.f32 %v689, %v1533
    %v1662 = vadd.f32 %v695, %v1534
    %v1663 = vadd.f32 %v701, %v1535
    %v1664 = vadd.f32 %v707, %v1536
    %v1665 = vadd.f32 %v713, %v1537
    %v1666 = vadd.f32 %v719, %v1538
    %v1667 = vadd.f32 %v725, %v1539
    %v1668 = vadd.f32 %v731, %v1540
    %v1669 = vadd.f32 %v737, %v1541
    %v1670 = vadd.f32 %v743, %v1542
    %v1671 = vadd.f32 %v749, %v1543
    %v1672 = vadd.f32 %v755, %v1544
    %v1673 = vadd.f32 %v761, %v1545
    %v1674 = vadd.f32 %v767, %v1546
    %v1675 = vadd.f32 %v773, %v1547
    %v1676 = vadd.f32 %v779, %v1548
    %v1677 = vadd.f32 %v785, %v1549
    %v1678 = vadd.f32 %v791, %v1550
    %v1679 = vadd.f32 %v797, %v1551
    %v1680 = vadd.f32 %v803, %v1552
    %v1681 = vadd.f32 %v809, %v1553
    %v1682 = vadd.f32 %v815, %v1554
    %v1683 = vadd.f32 %v821, %v1555
    %v1684 = vadd.f32 %v827, %v1556
    %v1685 = vadd.f32 %v833, %v1557
    %v1686 = vadd.f32 %v839, %v1558
    %v1687 = vadd.f32 %v845, %v1559
    %v1688 = vadd.f32 %v851, %v1560
    %v1689 = vadd.f32 %v857, %v1561
    %v1690 = vadd.f32 %v863, %v1562
    %v1691 = vadd.f32 %v869, %v1563
    %v1692 = vadd.f32 %v875, %v1564
    %v1693 = vadd.f32 %v881, %v1565
    %v1694 = vadd.f32 %v887, %v1566
    %v1695 = vadd.f32 %v893, %v1567
    %v1696 = vadd.f32 %v899, %v1568
    %v1697 = vadd.f32 %v905, %v1569
    %v1698 = vadd.f32 %v911, %v1570
    %v1699 = vadd.f32 %v917, %v1571
    %v1700 = vadd.f32 %v923, %v1572
    %v1701 = vadd.f32 %v929, %v1573
    %v1702 = vadd.f32 %v935, %v1574
    %v1703 = vadd.f32 %v941, %v1575
    %v1704 = vadd.f32 %v947, %v1576
    %v1705 = vadd.f32 %v953, %v1577
    %v1706 = vadd.f32 %v959, %v1578
    %v1707 = vadd.f32 %v965, %v1579
    %v1708 = vadd.f32 %v971, %v1580
    %v1709 = vadd.f32 %v977, %v1581
    %v1710 = vadd.f32 %v983, %v1582
    %v1711 = vadd.f32 %v989, %v1583
    %v1712 = vadd.f32 %v995, %v1584
    %v1713 = vadd.f32 %v1001, %v1585
    %v1714 = vadd.f32 %v1007, %v1586
    %v1715 = vadd.f32 %v1013, %v1587
    %v1716 = vadd.f32 %v1019, %v1588
    %v1717 = vadd.f32 %v1025, %v1589
    %v1718 = vadd.f32 %v1031, %v1590
    %v1719 = vadd.f32 %v1037, %v1591
    %v1720 = vadd.f32 %v1043, %v1592
    %v1721 = vadd.f32 %v1049, %v1593
    %v1722 = vadd.f32 %v1055, %v1594
    %v1723 = vadd.f32 %v1061, %v1595
    %v1724 = vadd.f32 %v1067, %v1596
    %v1725 = vadd.f32 %v1073, %v1597
    %v1726 = vadd.f32 %v1079, %v1598
    %v1727 = vadd.f32 %v1085, %v1599
    %v1728 = vadd.f32 %v1091, %v1600
    %v1729 = vadd.f32 %v1097, %v1601
    %v1730 = vadd.f32 %v1103, %v1602
    %v1731 = vadd.f32 %v1109, %v1603
    %v1732 = vadd.f32 %v1115, %v1604
    %v1733 = vadd.f32 %v1121, %v1605
    %v1734 = vadd.f32 %v1127, %v1606
    %v1735 = vadd.f32 %v1133, %v1607
    %v1736 = vadd.f32 %v1139, %v1608
    %v1737 = vadd.f32 %v1145, %v1609
    %v1738 = vadd.f32 %v1151, %v1610
    %v1739 = vadd.f32 %v1157, %v1611
    %v1740 = vadd.f32 %v1163, %v1612
    %v1741 = vadd.f32 %v1169, %v1613
    %v1742 = vadd.f32 %v1175, %v1614
    %v1743 = vadd.f32 %v1181, %v1615
    %v1744 = vadd.f32 %v1187, %v1616
    %v1745 = vadd.f32 %v1193, %v1617
    %v1746 = vadd.f32 %v1199, %v1618
    %v1747 = vadd.f32 %v1205, %v1619
    %v1748 = vadd.f32 %v1211, %v1620
    %v1749 = vadd.f32 %v1217, %v1621
    %v1750 = vadd.f32 %v1223, %v1622
    %v1751 = vadd.f32 %v1229, %v1623
    %v1752 = vadd.f32 %v1235, %v1624
    %v1753 = vadd.f32 %v1241, %v1625
    %v1754 = vadd.f32 %v1247, %v1626
    %v1755 = vadd.f32 %v1253, %v1627
    %v1756 = vadd.f32 %v1259, %v1628
    %v1757 = vadd.f32 %v1265, %v1629
    %v1758 = vadd.f32 %v1271, %v1630
    %v1759 = vadd.f32 %v1277, %v1631
    %v1760 = vadd.f32 %v1283, %v1632
    %v1761 = vadd.f32 %v1289, %v1633
    %v1762 = vadd.f32 %v1295, %v1634
    %v1763 = vadd.f32 %v1301, %v1635
    %v1764 = vadd.f32 %v1307, %v1636
    %v1765 = vadd.f32 %v1313, %v1637
    %v1766 = vadd.f32 %v1319, %v1638
    %v1767 = vadd.f32 %v1325, %v1639
    %v1768 = vadd.f32 %v1331, %v1640
    %v1769 = vadd.f32 %v1337, %v1641
    %v1770 = vadd.f32 %v1343, %v1642
    %v1771 = vadd.f32 %v1349, %v1643
    %v1772 = vadd.f32 %v1355, %v1644
    %v1773 = vadd.f32 %v1361, %v1645
    %v1774 = vadd.f32 %v1367, %v1646
    %v1775 = vadd.f32 %v1373, %v1647
    %v1776 = vadd.f32 %v1379, %v1648
    %v1777 = vadd.f32 %v1385, %v1649
    %v1778 = vadd.f32 %v1391, %v1650
    %v1779 = vpack.c.bf16 %v1652, %v1651
    %v1780 = vpack.c.bf16 %v1654, %v1653
    %v1781 = vpack.c.bf16 %v1656, %v1655
    %v1782 = vpack.c.bf16 %v1658, %v1657
    %v1783 = vpack.c.bf16 %v1660, %v1659
    %v1784 = vpack.c.bf16 %v1662, %v1661
    %v1785 = vpack.c.bf16 %v1664, %v1663
    %v1786 = vpack.c.bf16 %v1666, %v1665
    %v1787 = vpack.c.bf16 %v1668, %v1667
    %v1788 = vpack.c.bf16 %v1670, %v1669
    %v1789 = vpack.c.bf16 %v1672, %v1671
    %v1790 = vpack.c.bf16 %v1674, %v1673
    %v1791 = vpack.c.bf16 %v1676, %v1675
    %v1792 = vpack.c.bf16 %v1678, %v1677
    %v1793 = vpack.c.bf16 %v1680, %v1679
    %v1794 = vpack.c.bf16 %v1682, %v1681
    %v1795 = vpack.c.bf16 %v1684, %v1683
    %v1796 = vpack.c.bf16 %v1686, %v1685
    %v1797 = vpack.c.bf16 %v1688, %v1687
    %v1798 = vpack.c.bf16 %v1690, %v1689
    %v1799 = vpack.c.bf16 %v1692, %v1691
    %v1800 = vpack.c.bf16 %v1694, %v1693
    %v1801 = vpack.c.bf16 %v1696, %v1695
    %v1802 = vpack.c.bf16 %v1698, %v1697
    %v1803 = vpack.c.bf16 %v1700, %v1699
    %v1804 = vpack.c.bf16 %v1702, %v1701
    %v1805 = vpack.c.bf16 %v1704, %v1703
    %v1806 = vpack.c.bf16 %v1706, %v1705
    %v1807 = vpack.c.bf16 %v1708, %v1707
    %v1808 = vpack.c.bf16 %v1710, %v1709
    %v1809 = vpack.c.bf16 %v1712, %v1711
    %v1810 = vpack.c.bf16 %v1714, %v1713
    %v1811 = vpack.c.bf16 %v1716, %v1715
    %v1812 = vpack.c.bf16 %v1718, %v1717
    %v1813 = vpack.c.bf16 %v1720, %v1719
    %v1814 = vpack.c.bf16 %v1722, %v1721
    %v1815 = vpack.c.bf16 %v1724, %v1723
    %v1816 = vpack.c.bf16 %v1726, %v1725
    %v1817 = vpack.c.bf16 %v1728, %v1727
    %v1818 = vpack.c.bf16 %v1730, %v1729
    %v1819 = vpack.c.bf16 %v1732, %v1731
    %v1820 = vpack.c.bf16 %v1734, %v1733
    %v1821 = vpack.c.bf16 %v1736, %v1735
    %v1822 = vpack.c.bf16 %v1738, %v1737
    %v1823 = vpack.c.bf16 %v1740, %v1739
    %v1824 = vpack.c.bf16 %v1742, %v1741
    %v1825 = vpack.c.bf16 %v1744, %v1743
    %v1826 = vpack.c.bf16 %v1746, %v1745
    %v1827 = vpack.c.bf16 %v1748, %v1747
    %v1828 = vpack.c.bf16 %v1750, %v1749
    %v1829 = vpack.c.bf16 %v1752, %v1751
    %v1830 = vpack.c.bf16 %v1754, %v1753
    %v1831 = vpack.c.bf16 %v1756, %v1755
    %v1832 = vpack.c.bf16 %v1758, %v1757
    %v1833 = vpack.c.bf16 %v1760, %v1759
    %v1834 = vpack.c.bf16 %v1762, %v1761
    %v1835 = vpack.c.bf16 %v1764, %v1763
    %v1836 = vpack.c.bf16 %v1766, %v1765
    %v1837 = vpack.c.bf16 %v1768, %v1767
    %v1838 = vpack.c.bf16 %v1770, %v1769
    %v1839 = vpack.c.bf16 %v1772, %v1771
    %v1840 = vpack.c.bf16 %v1774, %v1773
    %v1841 = vpack.c.bf16 %v1776, %v1775
    %v1842 = vpack.c.bf16 %v1778, %v1777
    %v1907 = vunpack.c.l.b16 %v1779
    %v1908 = vunpack.c.h.b16 %v1779
    %v1909 = vunpack.c.l.b16 %v1780
    %v1910 = vunpack.c.h.b16 %v1780
    %v1911 = vunpack.c.l.b16 %v1781
    %v1912 = vunpack.c.h.b16 %v1781
    %v1913 = vunpack.c.l.b16 %v1782
    %v1914 = vunpack.c.h.b16 %v1782
    %v1915 = vunpack.c.l.b16 %v1783
    %v1916 = vunpack.c.h.b16 %v1783
    %v1917 = vunpack.c.l.b16 %v1784
    %v1918 = vunpack.c.h.b16 %v1784
    %v1919 = vunpack.c.l.b16 %v1785
    %v1920 = vunpack.c.h.b16 %v1785
    %v1921 = vunpack.c.l.b16 %v1786
    %v1922 = vunpack.c.h.b16 %v1786
    %v1923 = vunpack.c.l.b16 %v1787
    %v1924 = vunpack.c.h.b16 %v1787
    %v1925 = vunpack.c.l.b16 %v1788
    %v1926 = vunpack.c.h.b16 %v1788
    %v1927 = vunpack.c.l.b16 %v1789
    %v1928 = vunpack.c.h.b16 %v1789
    %v1929 = vunpack.c.l.b16 %v1790
    %v1930 = vunpack.c.h.b16 %v1790
    %v1931 = vunpack.c.l.b16 %v1791
    %v1932 = vunpack.c.h.b16 %v1791
    %v1933 = vunpack.c.l.b16 %v1792
    %v1934 = vunpack.c.h.b16 %v1792
    %v1935 = vunpack.c.l.b16 %v1793
    %v1936 = vunpack.c.h.b16 %v1793
    %v1937 = vunpack.c.l.b16 %v1794
    %v1938 = vunpack.c.h.b16 %v1794
    %v1939 = vunpack.c.l.b16 %v1795
    %v1940 = vunpack.c.h.b16 %v1795
    %v1941 = vunpack.c.l.b16 %v1796
    %v1942 = vunpack.c.h.b16 %v1796
    %v1943 = vunpack.c.l.b16 %v1797
    %v1944 = vunpack.c.h.b16 %v1797
    %v1945 = vunpack.c.l.b16 %v1798
    %v1946 = vunpack.c.h.b16 %v1798
    %v1947 = vunpack.c.l.b16 %v1799
    %v1948 = vunpack.c.h.b16 %v1799
    %v1949 = vunpack.c.l.b16 %v1800
    %v1950 = vunpack.c.h.b16 %v1800
    %v1951 = vunpack.c.l.b16 %v1801
    %v1952 = vunpack.c.h.b16 %v1801
    %v1953 = vunpack.c.l.b16 %v1802
    %v1954 = vunpack.c.h.b16 %v1802
    %v1955 = vunpack.c.l.b16 %v1803
    %v1956 = vunpack.c.h.b16 %v1803
    %v1957 = vunpack.c.l.b16 %v1804
    %v1958 = vunpack.c.h.b16 %v1804
    %v1959 = vunpack.c.l.b16 %v1805
    %v1960 = vunpack.c.h.b16 %v1805
    %v1961 = vunpack.c.l.b16 %v1806
    %v1962 = vunpack.c.h.b16 %v1806
    %v1963 = vunpack.c.l.b16 %v1807
    %v1964 = vunpack.c.h.b16 %v1807
    %v1965 = vunpack.c.l.b16 %v1808
    %v1966 = vunpack.c.h.b16 %v1808
    %v1967 = vunpack.c.l.b16 %v1809
    %v1968 = vunpack.c.h.b16 %v1809
    %v1969 = vunpack.c.l.b16 %v1810
    %v1970 = vunpack.c.h.b16 %v1810
    %v1971 = vunpack.c.l.b16 %v1811
    %v1972 = vunpack.c.h.b16 %v1811
    %v1973 = vunpack.c.l.b16 %v1812
    %v1974 = vunpack.c.h.b16 %v1812
    %v1975 = vunpack.c.l.b16 %v1813
    %v1976 = vunpack.c.h.b16 %v1813
    %v1977 = vunpack.c.l.b16 %v1814
    %v1978 = vunpack.c.h.b16 %v1814
    %v1979 = vunpack.c.l.b16 %v1815
    %v1980 = vunpack.c.h.b16 %v1815
    %v1981 = vunpack.c.l.b16 %v1816
    %v1982 = vunpack.c.h.b16 %v1816
    %v1983 = vunpack.c.l.b16 %v1817
    %v1984 = vunpack.c.h.b16 %v1817
    %v1985 = vunpack.c.l.b16 %v1818
    %v1986 = vunpack.c.h.b16 %v1818
    %v1987 = vunpack.c.l.b16 %v1819
    %v1988 = vunpack.c.h.b16 %v1819
    %v1989 = vunpack.c.l.b16 %v1820
    %v1990 = vunpack.c.h.b16 %v1820
    %v1991 = vunpack.c.l.b16 %v1821
    %v1992 = vunpack.c.h.b16 %v1821
    %v1993 = vunpack.c.l.b16 %v1822
    %v1994 = vunpack.c.h.b16 %v1822
    %v1995 = vunpack.c.l.b16 %v1823
    %v1996 = vunpack.c.h.b16 %v1823
    %v1997 = vunpack.c.l.b16 %v1824
    %v1998 = vunpack.c.h.b16 %v1824
    %v1999 = vunpack.c.l.b16 %v1825
    %v2000 = vunpack.c.h.b16 %v1825
    %v2001 = vunpack.c.l.b16 %v1826
    %v2002 = vunpack.c.h.b16 %v1826
    %v2003 = vunpack.c.l.b16 %v1827
    %v2004 = vunpack.c.h.b16 %v1827
    %v2005 = vunpack.c.l.b16 %v1828
    %v2006 = vunpack.c.h.b16 %v1828
    %v2007 = vunpack.c.l.b16 %v1829
    %v2008 = vunpack.c.h.b16 %v1829
    %v2009 = vunpack.c.l.b16 %v1830
    %v2010 = vunpack.c.h.b16 %v1830
    %v2011 = vunpack.c.l.b16 %v1831
    %v2012 = vunpack.c.h.b16 %v1831
    %v2013 = vunpack.c.l.b16 %v1832
    %v2014 = vunpack.c.h.b16 %v1832
    %v2015 = vunpack.c.l.b16 %v1833
    %v2016 = vunpack.c.h.b16 %v1833
    %v2017 = vunpack.c.l.b16 %v1834
    %v2018 = vunpack.c.h.b16 %v1834
    %v2019 = vunpack.c.l.b16 %v1835
    %v2020 = vunpack.c.h.b16 %v1835
    %v2021 = vunpack.c.l.b16 %v1836
    %v2022 = vunpack.c.h.b16 %v1836
    %v2023 = vunpack.c.l.b16 %v1837
    %v2024 = vunpack.c.h.b16 %v1837
    %v2025 = vunpack.c.l.b16 %v1838
    %v2026 = vunpack.c.h.b16 %v1838
    %v2027 = vunpack.c.l.b16 %v1839
    %v2028 = vunpack.c.h.b16 %v1839
    %v2029 = vunpack.c.l.b16 %v1840
    %v2030 = vunpack.c.h.b16 %v1840
    %v2031 = vunpack.c.l.b16 %v1841
    %v2032 = vunpack.c.h.b16 %v1841
    %v2033 = vunpack.c.l.b16 %v1842
    %v2034 = vunpack.c.h.b16 %v1842
    %v2035 = vpack.c.b16 %v1907, %v1907
    %v2036 = vpack.c.b16 %v1908, %v1908
    %v2037 = vpack.c.b16 %v1909, %v1909
    %v2038 = vpack.c.b16 %v1910, %v1910
    %v2039 = vpack.c.b16 %v1911, %v1911
    %v2040 = vpack.c.b16 %v1912, %v1912
    %v2041 = vpack.c.b16 %v1913, %v1913
    %v2042 = vpack.c.b16 %v1914, %v1914
    %v2043 = vpack.c.b16 %v1915, %v1915
    %v2044 = vpack.c.b16 %v1916, %v1916
    %v2045 = vpack.c.b16 %v1917, %v1917
    %v2046 = vpack.c.b16 %v1918, %v1918
    %v2047 = vpack.c.b16 %v1919, %v1919
    %v2048 = vpack.c.b16 %v1920, %v1920
    %v2049 = vpack.c.b16 %v1921, %v1921
    %v2050 = vpack.c.b16 %v1922, %v1922
    %v2051 = vpack.c.b16 %v1923, %v1923
    %v2052 = vpack.c.b16 %v1924, %v1924
    %v2053 = vpack.c.b16 %v1925, %v1925
    %v2054 = vpack.c.b16 %v1926, %v1926
    %v2055 = vpack.c.b16 %v1927, %v1927
    %v2056 = vpack.c.b16 %v1928, %v1928
    %v2057 = vpack.c.b16 %v1929, %v1929
    %v2058 = vpack.c.b16 %v1930, %v1930
    %v2059 = vpack.c.b16 %v1931, %v1931
    %v2060 = vpack.c.b16 %v1932, %v1932
    %v2061 = vpack.c.b16 %v1933, %v1933
    %v2062 = vpack.c.b16 %v1934, %v1934
    %v2063 = vpack.c.b16 %v1935, %v1935
    %v2064 = vpack.c.b16 %v1936, %v1936
    %v2065 = vpack.c.b16 %v1937, %v1937
    %v2066 = vpack.c.b16 %v1938, %v1938
    %v2067 = vpack.c.b16 %v1939, %v1939
    %v2068 = vpack.c.b16 %v1940, %v1940
    %v2069 = vpack.c.b16 %v1941, %v1941
    %v2070 = vpack.c.b16 %v1942, %v1942
    %v2071 = vpack.c.b16 %v1943, %v1943
    %v2072 = vpack.c.b16 %v1944, %v1944
    %v2073 = vpack.c.b16 %v1945, %v1945
    %v2074 = vpack.c.b16 %v1946, %v1946
    %v2075 = vpack.c.b16 %v1947, %v1947
    %v2076 = vpack.c.b16 %v1948, %v1948
    %v2077 = vpack.c.b16 %v1949, %v1949
    %v2078 = vpack.c.b16 %v1950, %v1950
    %v2079 = vpack.c.b16 %v1951, %v1951
    %v2080 = vpack.c.b16 %v1952, %v1952
    %v2081 = vpack.c.b16 %v1953, %v1953
    %v2082 = vpack.c.b16 %v1954, %v1954
    %v2083 = vpack.c.b16 %v1955, %v1955
    %v2084 = vpack.c.b16 %v1956, %v1956
    %v2085 = vpack.c.b16 %v1957, %v1957
    %v2086 = vpack.c.b16 %v1958, %v1958
    %v2087 = vpack.c.b16 %v1959, %v1959
    %v2088 = vpack.c.b16 %v1960, %v1960
    %v2089 = vpack.c.b16 %v1961, %v1961
    %v2090 = vpack.c.b16 %v1962, %v1962
    %v2091 = vpack.c.b16 %v1963, %v1963
    %v2092 = vpack.c.b16 %v1964, %v1964
    %v2093 = vpack.c.b16 %v1965, %v1965
    %v2094 = vpack.c.b16 %v1966, %v1966
    %v2095 = vpack.c.b16 %v1967, %v1967
    %v2096 = vpack.c.b16 %v1968, %v1968
    %v2097 = vpack.c.b16 %v1969, %v1969
    %v2098 = vpack.c.b16 %v1970, %v1970
    %v2099 = vpack.c.b16 %v1971, %v1971
    %v2100 = vpack.c.b16 %v1972, %v1972
    %v2101 = vpack.c.b16 %v1973, %v1973
    %v2102 = vpack.c.b16 %v1974, %v1974
    %v2103 = vpack.c.b16 %v1975, %v1975
    %v2104 = vpack.c.b16 %v1976, %v1976
    %v2105 = vpack.c.b16 %v1977, %v1977
    %v2106 = vpack.c.b16 %v1978, %v1978
    %v2107 = vpack.c.b16 %v1979, %v1979
    %v2108 = vpack.c.b16 %v1980, %v1980
    %v2109 = vpack.c.b16 %v1981, %v1981
    %v2110 = vpack.c.b16 %v1982, %v1982
    %v2111 = vpack.c.b16 %v1983, %v1983
    %v2112 = vpack.c.b16 %v1984, %v1984
    %v2113 = vpack.c.b16 %v1985, %v1985
    %v2114 = vpack.c.b16 %v1986, %v1986
    %v2115 = vpack.c.b16 %v1987, %v1987
    %v2116 = vpack.c.b16 %v1988, %v1988
    %v2117 = vpack.c.b16 %v1989, %v1989
    %v2118 = vpack.c.b16 %v1990, %v1990
    %v2119 = vpack.c.b16 %v1991, %v1991
    %v2120 = vpack.c.b16 %v1992, %v1992
    %v2121 = vpack.c.b16 %v1993, %v1993
    %v2122 = vpack.c.b16 %v1994, %v1994
    %v2123 = vpack.c.b16 %v1995, %v1995
    %v2124 = vpack.c.b16 %v1996, %v1996
    %v2125 = vpack.c.b16 %v1997, %v1997
    %v2126 = vpack.c.b16 %v1998, %v1998
    %v2127 = vpack.c.b16 %v1999, %v1999
    %v2128 = vpack.c.b16 %v2000, %v2000
    %v2129 = vpack.c.b16 %v2001, %v2001
    %v2130 = vpack.c.b16 %v2002, %v2002
    %v2131 = vpack.c.b16 %v2003, %v2003
    %v2132 = vpack.c.b16 %v2004, %v2004
    %v2133 = vpack.c.b16 %v2005, %v2005
    %v2134 = vpack.c.b16 %v2006, %v2006
    %v2135 = vpack.c.b16 %v2007, %v2007
    %v2136 = vpack.c.b16 %v2008, %v2008
    %v2137 = vpack.c.b16 %v2009, %v2009
    %v2138 = vpack.c.b16 %v2010, %v2010
    %v2139 = vpack.c.b16 %v2011, %v2011
    %v2140 = vpack.c.b16 %v2012, %v2012
    %v2141 = vpack.c.b16 %v2013, %v2013
    %v2142 = vpack.c.b16 %v2014, %v2014
    %v2143 = vpack.c.b16 %v2015, %v2015
    %v2144 = vpack.c.b16 %v2016, %v2016
    %v2145 = vpack.c.b16 %v2017, %v2017
    %v2146 = vpack.c.b16 %v2018, %v2018
    %v2147 = vpack.c.b16 %v2019, %v2019
    %v2148 = vpack.c.b16 %v2020, %v2020
    %v2149 = vpack.c.b16 %v2021, %v2021
    %v2150 = vpack.c.b16 %v2022, %v2022
    %v2151 = vpack.c.b16 %v2023, %v2023
    %v2152 = vpack.c.b16 %v2024, %v2024
    %v2153 = vpack.c.b16 %v2025, %v2025
    %v2154 = vpack.c.b16 %v2026, %v2026
    %v2155 = vpack.c.b16 %v2027, %v2027
    %v2156 = vpack.c.b16 %v2028, %v2028
    %v2157 = vpack.c.b16 %v2029, %v2029
    %v2158 = vpack.c.b16 %v2030, %v2030
    %v2159 = vpack.c.b16 %v2031, %v2031
    %v2160 = vpack.c.b16 %v2032, %v2032
    %v2161 = vpack.c.b16 %v2033, %v2033
    %v2162 = vpack.c.b16 %v2034, %v2034
    %2291 = vst [vmem:[#allocation2] sm:$0xf] %v2035
    %2292 = vst [vmem:[#allocation2 + $0x4] sm:$0xf] %v2036
    %2293 = vst [vmem:[#allocation2 + $0x8] sm:$0xf] %v2037
    %2294 = vst [vmem:[#allocation2 + $0xc] sm:$0xf] %v2038
    %2295 = vst [vmem:[#allocation2 + $0x10] sm:$0xf] %v2039
    %2296 = vst [vmem:[#allocation2 + $0x14] sm:$0xf] %v2040
    %2297 = vst [vmem:[#allocation2 + $0x18] sm:$0xf] %v2041
    %2298 = vst [vmem:[#allocation2 + $0x1c] sm:$0xf] %v2042
    %2299 = vst [vmem:[#allocation2 + $0x20] sm:$0xf] %v2043
    %2300 = vst [vmem:[#allocation2 + $0x24] sm:$0xf] %v2044
    %2301 = vst [vmem:[#allocation2 + $0x28] sm:$0xf] %v2045
    %2302 = vst [vmem:[#allocation2 + $0x2c] sm:$0xf] %v2046
    %2303 = vst [vmem:[#allocation2 + $0x30] sm:$0xf] %v2047
    %2304 = vst [vmem:[#allocation2 + $0x34] sm:$0xf] %v2048
    %2305 = vst [vmem:[#allocation2 + $0x38] sm:$0xf] %v2049
    %2306 = vst [vmem:[#allocation2 + $0x3c] sm:$0xf] %v2050
    %2307 = vst [vmem:[#allocation2 + $0x40] sm:$0xf] %v2051
    %2308 = vst [vmem:[#allocation2 + $0x44] sm:$0xf] %v2052
    %2309 = vst [vmem:[#allocation2 + $0x48] sm:$0xf] %v2053
    %2310 = vst [vmem:[#allocation2 + $0x4c] sm:$0xf] %v2054
    %2311 = vst [vmem:[#allocation2 + $0x50] sm:$0xf] %v2055
    %2312 = vst [vmem:[#allocation2 + $0x54] sm:$0xf] %v2056
    %2313 = vst [vmem:[#allocation2 + $0x58] sm:$0xf] %v2057
    %2314 = vst [vmem:[#allocation2 + $0x5c] sm:$0xf] %v2058
    %2315 = vst [vmem:[#allocation2 + $0x60] sm:$0xf] %v2059
    %2316 = vst [vmem:[#allocation2 + $0x64] sm:$0xf] %v2060
    %2317 = vst [vmem:[#allocation2 + $0x68] sm:$0xf] %v2061
    %2318 = vst [vmem:[#allocation2 + $0x6c] sm:$0xf] %v2062
    %2319 = vst [vmem:[#allocation2 + $0x70] sm:$0xf] %v2063
    %2320 = vst [vmem:[#allocation2 + $0x74] sm:$0xf] %v2064
    %2321 = vst [vmem:[#allocation2 + $0x78] sm:$0xf] %v2065
    %2322 = vst [vmem:[#allocation2 + $0x7c] sm:$0xf] %v2066
    %2323 = vst [vmem:[#allocation2 + $0x80] sm:$0xf] %v2067
    %2324 = vst [vmem:[#allocation2 + $0x84] sm:$0xf] %v2068
    %2325 = vst [vmem:[#allocation2 + $0x88] sm:$0xf] %v2069
    %2326 = vst [vmem:[#allocation2 + $0x8c] sm:$0xf] %v2070
    %2327 = vst [vmem:[#allocation2 + $0x90] sm:$0xf] %v2071
    %2328 = vst [vmem:[#allocation2 + $0x94] sm:$0xf] %v2072
    %2329 = vst [vmem:[#allocation2 + $0x98] sm:$0xf] %v2073
    %2330 = vst [vmem:[#allocation2 + $0x9c] sm:$0xf] %v2074
    %2331 = vst [vmem:[#allocation2 + $0xa0] sm:$0xf] %v2075
    %2332 = vst [vmem:[#allocation2 + $0xa4] sm:$0xf] %v2076
    %2333 = vst [vmem:[#allocation2 + $0xa8] sm:$0xf] %v2077
    %2334 = vst [vmem:[#allocation2 + $0xac] sm:$0xf] %v2078
    %2335 = vst [vmem:[#allocation2 + $0xb0] sm:$0xf] %v2079
    %2336 = vst [vmem:[#allocation2 + $0xb4] sm:$0xf] %v2080
    %2337 = vst [vmem:[#allocation2 + $0xb8] sm:$0xf] %v2081
    %2338 = vst [vmem:[#allocation2 + $0xbc] sm:$0xf] %v2082
    %2339 = vst [vmem:[#allocation2 + $0xc0] sm:$0xf] %v2083
    %2340 = vst [vmem:[#allocation2 + $0xc4] sm:$0xf] %v2084
    %2341 = vst [vmem:[#allocation2 + $0xc8] sm:$0xf] %v2085
    %2342 = vst [vmem:[#allocation2 + $0xcc] sm:$0xf] %v2086
    %2343 = vst [vmem:[#allocation2 + $0xd0] sm:$0xf] %v2087
    %2344 = vst [vmem:[#allocation2 + $0xd4] sm:$0xf] %v2088
    %2345 = vst [vmem:[#allocation2 + $0xd8] sm:$0xf] %v2089
    %2346 = vst [vmem:[#allocation2 + $0xdc] sm:$0xf] %v2090
    %2347 = vst [vmem:[#allocation2 + $0xe0] sm:$0xf] %v2091
    %2348 = vst [vmem:[#allocation2 + $0xe4] sm:$0xf] %v2092
    %2349 = vst [vmem:[#allocation2 + $0xe8] sm:$0xf] %v2093
    %2350 = vst [vmem:[#allocation2 + $0xec] sm:$0xf] %v2094
    %2351 = vst [vmem:[#allocation2 + $0xf0] sm:$0xf] %v2095
    %2352 = vst [vmem:[#allocation2 + $0xf4] sm:$0xf] %v2096
    %2353 = vst [vmem:[#allocation2 + $0xf8] sm:$0xf] %v2097
    %2354 = vst [vmem:[#allocation2 + $0xfc] sm:$0xf] %v2098
    %2355 = vst [vmem:[#allocation2 + $0x100] sm:$0xf] %v2099
    %2356 = vst [vmem:[#allocation2 + $0x104] sm:$0xf] %v2100
    %2357 = vst [vmem:[#allocation2 + $0x108] sm:$0xf] %v2101
    %2358 = vst [vmem:[#allocation2 + $0x10c] sm:$0xf] %v2102
    %2359 = vst [vmem:[#allocation2 + $0x110] sm:$0xf] %v2103
    %2360 = vst [vmem:[#allocation2 + $0x114] sm:$0xf] %v2104
    %2361 = vst [vmem:[#allocation2 + $0x118] sm:$0xf] %v2105
    %2362 = vst [vmem:[#allocation2 + $0x11c] sm:$0xf] %v2106
    %2363 = vst [vmem:[#allocation2 + $0x120] sm:$0xf] %v2107
    %2364 = vst [vmem:[#allocation2 + $0x124] sm:$0xf] %v2108
    %2365 = vst [vmem:[#allocation2 + $0x128] sm:$0xf] %v2109
    %2366 = vst [vmem:[#allocation2 + $0x12c] sm:$0xf] %v2110
    %2367 = vst [vmem:[#allocation2 + $0x130] sm:$0xf] %v2111
    %2368 = vst [vmem:[#allocation2 + $0x134] sm:$0xf] %v2112
    %2369 = vst [vmem:[#allocation2 + $0x138] sm:$0xf] %v2113
    %2370 = vst [vmem:[#allocation2 + $0x13c] sm:$0xf] %v2114
    %2371 = vst [vmem:[#allocation2 + $0x140] sm:$0xf] %v2115
    %2372 = vst [vmem:[#allocation2 + $0x144] sm:$0xf] %v2116
    %2373 = vst [vmem:[#allocation2 + $0x148] sm:$0xf] %v2117
    %2374 = vst [vmem:[#allocation2 + $0x14c] sm:$0xf] %v2118
    %2375 = vst [vmem:[#allocation2 + $0x150] sm:$0xf] %v2119
    %2376 = vst [vmem:[#allocation2 + $0x154] sm:$0xf] %v2120
    %2377 = vst [vmem:[#allocation2 + $0x158] sm:$0xf] %v2121
    %2378 = vst [vmem:[#allocation2 + $0x15c] sm:$0xf] %v2122
    %2379 = vst [vmem:[#allocation2 + $0x160] sm:$0xf] %v2123
    %2380 = vst [vmem:[#allocation2 + $0x164] sm:$0xf] %v2124
    %2381 = vst [vmem:[#allocation2 + $0x168] sm:$0xf] %v2125
    %2382 = vst [vmem:[#allocation2 + $0x16c] sm:$0xf] %v2126
    %2383 = vst [vmem:[#allocation2 + $0x170] sm:$0xf] %v2127
    %2384 = vst [vmem:[#allocation2 + $0x174] sm:$0xf] %v2128
    %2385 = vst [vmem:[#allocation2 + $0x178] sm:$0xf] %v2129
    %2386 = vst [vmem:[#allocation2 + $0x17c] sm:$0xf] %v2130
    %2387 = vst [vmem:[#allocation2 + $0x180] sm:$0xf] %v2131
    %2388 = vst [vmem:[#allocation2 + $0x184] sm:$0xf] %v2132
    %2389 = vst [vmem:[#allocation2 + $0x188] sm:$0xf] %v2133
    %2390 = vst [vmem:[#allocation2 + $0x18c] sm:$0xf] %v2134
    %2391 = vst [vmem:[#allocation2 + $0x190] sm:$0xf] %v2135
    %2392 = vst [vmem:[#allocation2 + $0x194] sm:$0xf] %v2136
    %2393 = vst [vmem:[#allocation2 + $0x198] sm:$0xf] %v2137
    %2394 = vst [vmem:[#allocation2 + $0x19c] sm:$0xf] %v2138
    %2395 = vst [vmem:[#allocation2 + $0x1a0] sm:$0xf] %v2139
    %2396 = vst [vmem:[#allocation2 + $0x1a4] sm:$0xf] %v2140
    %2397 = vst [vmem:[#allocation2 + $0x1a8] sm:$0xf] %v2141
    %2398 = vst [vmem:[#allocation2 + $0x1ac] sm:$0xf] %v2142
    %2399 = vst [vmem:[#allocation2 + $0x1b0] sm:$0xf] %v2143
    %2400 = vst [vmem:[#allocation2 + $0x1b4] sm:$0xf] %v2144
    %2401 = vst [vmem:[#allocation2 + $0x1b8] sm:$0xf] %v2145
    %2402 = vst [vmem:[#allocation2 + $0x1bc] sm:$0xf] %v2146
    %2403 = vst [vmem:[#allocation2 + $0x1c0] sm:$0xf] %v2147
    %2404 = vst [vmem:[#allocation2 + $0x1c4] sm:$0xf] %v2148
    %2405 = vst [vmem:[#allocation2 + $0x1c8] sm:$0xf] %v2149
    %2406 = vst [vmem:[#allocation2 + $0x1cc] sm:$0xf] %v2150
    %2407 = vst [vmem:[#allocation2 + $0x1d0] sm:$0xf] %v2151
    %2408 = vst [vmem:[#allocation2 + $0x1d4] sm:$0xf] %v2152
    %2409 = vst [vmem:[#allocation2 + $0x1d8] sm:$0xf] %v2153
    %2410 = vst [vmem:[#allocation2 + $0x1dc] sm:$0xf] %v2154
    %2411 = vst [vmem:[#allocation2 + $0x1e0] sm:$0xf] %v2155
    %2412 = vst [vmem:[#allocation2 + $0x1e4] sm:$0xf] %v2156
    %2413 = vst [vmem:[#allocation2 + $0x1e8] sm:$0xf] %v2157
    %2414 = vst [vmem:[#allocation2 + $0x1ec] sm:$0xf] %v2158
    %2415 = vst [vmem:[#allocation2 + $0x1f0] sm:$0xf] %v2159
    %2416 = vst [vmem:[#allocation2 + $0x1f4] sm:$0xf] %v2160
    %2417 = vst [vmem:[#allocation2 + $0x1f8] sm:$0xf] %v2161
    %2418 = vst [vmem:[#allocation2 + $0x1fc] sm:$0xf] %v2162
    %v2419 = vadd.f32 %v631, %v1523
    %v2420 = vadd.f32 %v637, %v1524
    %v2421 = vadd.f32 %v643, %v1525
    %v2422 = vadd.f32 %v649, %v1526
    %v2423 = vadd.f32 %v655, %v1527
    %v2424 = vadd.f32 %v661, %v1528
    %v2425 = vadd.f32 %v667, %v1529
    %v2426 = vadd.f32 %v673, %v1530
    %v2427 = vadd.f32 %v679, %v1531
    %v2428 = vadd.f32 %v685, %v1532
    %v2429 = vadd.f32 %v691, %v1533
    %v2430 = vadd.f32 %v697, %v1534
    %v2431 = vadd.f32 %v703, %v1535
    %v2432 = vadd.f32 %v709, %v1536
    %v2433 = vadd.f32 %v715, %v1537
    %v2434 = vadd.f32 %v721, %v1538
    %v2435 = vadd.f32 %v727, %v1539
    %v2436 = vadd.f32 %v733, %v1540
    %v2437 = vadd.f32 %v739, %v1541
    %v2438 = vadd.f32 %v745, %v1542
    %v2439 = vadd.f32 %v751, %v1543
    %v2440 = vadd.f32 %v757, %v1544
    %v2441 = vadd.f32 %v763, %v1545
    %v2442 = vadd.f32 %v769, %v1546
    %v2443 = vadd.f32 %v775, %v1547
    %v2444 = vadd.f32 %v781, %v1548
    %v2445 = vadd.f32 %v787, %v1549
    %v2446 = vadd.f32 %v793, %v1550
    %v2447 = vadd.f32 %v799, %v1551
    %v2448 = vadd.f32 %v805, %v1552
    %v2449 = vadd.f32 %v811, %v1553
    %v2450 = vadd.f32 %v817, %v1554
    %v2451 = vadd.f32 %v823, %v1555
    %v2452 = vadd.f32 %v829, %v1556
    %v2453 = vadd.f32 %v835, %v1557
    %v2454 = vadd.f32 %v841, %v1558
    %v2455 = vadd.f32 %v847, %v1559
    %v2456 = vadd.f32 %v853, %v1560
    %v2457 = vadd.f32 %v859, %v1561
    %v2458 = vadd.f32 %v865, %v1562
    %v2459 = vadd.f32 %v871, %v1563
    %v2460 = vadd.f32 %v877, %v1564
    %v2461 = vadd.f32 %v883, %v1565
    %v2462 = vadd.f32 %v889, %v1566
    %v2463 = vadd.f32 %v895, %v1567
    %v2464 = vadd.f32 %v901, %v1568
    %v2465 = vadd.f32 %v907, %v1569
    %v2466 = vadd.f32 %v913, %v1570
    %v2467 = vadd.f32 %v919, %v1571
    %v2468 = vadd.f32 %v925, %v1572
    %v2469 = vadd.f32 %v931, %v1573
    %v2470 = vadd.f32 %v937, %v1574
    %v2471 = vadd.f32 %v943, %v1575
    %v2472 = vadd.f32 %v949, %v1576
    %v2473 = vadd.f32 %v955, %v1577
    %v2474 = vadd.f32 %v961, %v1578
    %v2475 = vadd.f32 %v967, %v1579
    %v2476 = vadd.f32 %v973, %v1580
    %v2477 = vadd.f32 %v979, %v1581
    %v2478 = vadd.f32 %v985, %v1582
    %v2479 = vadd.f32 %v991, %v1583
    %v2480 = vadd.f32 %v997, %v1584
    %v2481 = vadd.f32 %v1003, %v1585
    %v2482 = vadd.f32 %v1009, %v1586
    %v2483 = vadd.f32 %v1015, %v1587
    %v2484 = vadd.f32 %v1021, %v1588
    %v2485 = vadd.f32 %v1027, %v1589
    %v2486 = vadd.f32 %v1033, %v1590
    %v2487 = vadd.f32 %v1039, %v1591
    %v2488 = vadd.f32 %v1045, %v1592
    %v2489 = vadd.f32 %v1051, %v1593
    %v2490 = vadd.f32 %v1057, %v1594
    %v2491 = vadd.f32 %v1063, %v1595
    %v2492 = vadd.f32 %v1069, %v1596
    %v2493 = vadd.f32 %v1075, %v1597
    %v2494 = vadd.f32 %v1081, %v1598
    %v2495 = vadd.f32 %v1087, %v1599
    %v2496 = vadd.f32 %v1093, %v1600
    %v2497 = vadd.f32 %v1099, %v1601
    %v2498 = vadd.f32 %v1105, %v1602
    %v2499 = vadd.f32 %v1111, %v1603
    %v2500 = vadd.f32 %v1117, %v1604
    %v2501 = vadd.f32 %v1123, %v1605
    %v2502 = vadd.f32 %v1129, %v1606
    %v2503 = vadd.f32 %v1135, %v1607
    %v2504 = vadd.f32 %v1141, %v1608
    %v2505 = vadd.f32 %v1147, %v1609
    %v2506 = vadd.f32 %v1153, %v1610
    %v2507 = vadd.f32 %v1159, %v1611
    %v2508 = vadd.f32 %v1165, %v1612
    %v2509 = vadd.f32 %v1171, %v1613
    %v2510 = vadd.f32 %v1177, %v1614
    %v2511 = vadd.f32 %v1183, %v1615
    %v2512 = vadd.f32 %v1189, %v1616
    %v2513 = vadd.f32 %v1195, %v1617
    %v2514 = vadd.f32 %v1201, %v1618
    %v2515 = vadd.f32 %v1207, %v1619
    %v2516 = vadd.f32 %v1213, %v1620
    %v2517 = vadd.f32 %v1219, %v1621
    %v2518 = vadd.f32 %v1225, %v1622
    %v2519 = vadd.f32 %v1231, %v1623
    %v2520 = vadd.f32 %v1237, %v1624
    %v2521 = vadd.f32 %v1243, %v1625
    %v2522 = vadd.f32 %v1249, %v1626
    %v2523 = vadd.f32 %v1255, %v1627
    %v2524 = vadd.f32 %v1261, %v1628
    %v2525 = vadd.f32 %v1267, %v1629
    %v2526 = vadd.f32 %v1273, %v1630
    %v2527 = vadd.f32 %v1279, %v1631
    %v2528 = vadd.f32 %v1285, %v1632
    %v2529 = vadd.f32 %v1291, %v1633
    %v2530 = vadd.f32 %v1297, %v1634
    %v2531 = vadd.f32 %v1303, %v1635
    %v2532 = vadd.f32 %v1309, %v1636
    %v2533 = vadd.f32 %v1315, %v1637
    %v2534 = vadd.f32 %v1321, %v1638
    %v2535 = vadd.f32 %v1327, %v1639
    %v2536 = vadd.f32 %v1333, %v1640
    %v2537 = vadd.f32 %v1339, %v1641
    %v2538 = vadd.f32 %v1345, %v1642
    %v2539 = vadd.f32 %v1351, %v1643
    %v2540 = vadd.f32 %v1357, %v1644
    %v2541 = vadd.f32 %v1363, %v1645
    %v2542 = vadd.f32 %v1369, %v1646
    %v2543 = vadd.f32 %v1375, %v1647
    %v2544 = vadd.f32 %v1381, %v1648
    %v2545 = vadd.f32 %v1387, %v1649
    %v2546 = vadd.f32 %v1393, %v1650
    %v2547 = vpack.c.bf16 %v2420, %v2419
    %v2548 = vpack.c.bf16 %v2422, %v2421
    %v2549 = vpack.c.bf16 %v2424, %v2423
    %v2550 = vpack.c.bf16 %v2426, %v2425
    %v2551 = vpack.c.bf16 %v2428, %v2427
    %v2552 = vpack.c.bf16 %v2430, %v2429
    %v2553 = vpack.c.bf16 %v2432, %v2431
    %v2554 = vpack.c.bf16 %v2434, %v2433
    %v2555 = vpack.c.bf16 %v2436, %v2435
    %v2556 = vpack.c.bf16 %v2438, %v2437
    %v2557 = vpack.c.bf16 %v2440, %v2439
    %v2558 = vpack.c.bf16 %v2442, %v2441
    %v2559 = vpack.c.bf16 %v2444, %v2443
    %v2560 = vpack.c.bf16 %v2446, %v2445
    %v2561 = vpack.c.bf16 %v2448, %v2447
    %v2562 = vpack.c.bf16 %v2450, %v2449
    %v2563 = vpack.c.bf16 %v2452, %v2451
    %v2564 = vpack.c.bf16 %v2454, %v2453
    %v2565 = vpack.c.bf16 %v2456, %v2455
    %v2566 = vpack.c.bf16 %v2458, %v2457
    %v2567 = vpack.c.bf16 %v2460, %v2459
    %v2568 = vpack.c.bf16 %v2462, %v2461
    %v2569 = vpack.c.bf16 %v2464, %v2463
    %v2570 = vpack.c.bf16 %v2466, %v2465
    %v2571 = vpack.c.bf16 %v2468, %v2467
    %v2572 = vpack.c.bf16 %v2470, %v2469
    %v2573 = vpack.c.bf16 %v2472, %v2471
    %v2574 = vpack.c.bf16 %v2474, %v2473
    %v2575 = vpack.c.bf16 %v2476, %v2475
    %v2576 = vpack.c.bf16 %v2478, %v2477
    %v2577 = vpack.c.bf16 %v2480, %v2479
    %v2578 = vpack.c.bf16 %v2482, %v2481
    %v2579 = vpack.c.bf16 %v2484, %v2483
    %v2580 = vpack.c.bf16 %v2486, %v2485
    %v2581 = vpack.c.bf16 %v2488, %v2487
    %v2582 = vpack.c.bf16 %v2490, %v2489
    %v2583 = vpack.c.bf16 %v2492, %v2491
    %v2584 = vpack.c.bf16 %v2494, %v2493
    %v2585 = vpack.c.bf16 %v2496, %v2495
    %v2586 = vpack.c.bf16 %v2498, %v2497
    %v2587 = vpack.c.bf16 %v2500, %v2499
    %v2588 = vpack.c.bf16 %v2502, %v2501
    %v2589 = vpack.c.bf16 %v2504, %v2503
    %v2590 = vpack.c.bf16 %v2506, %v2505
    %v2591 = vpack.c.bf16 %v2508, %v2507
    %v2592 = vpack.c.bf16 %v2510, %v2509
    %v2593 = vpack.c.bf16 %v2512, %v2511
    %v2594 = vpack.c.bf16 %v2514, %v2513
    %v2595 = vpack.c.bf16 %v2516, %v2515
    %v2596 = vpack.c.bf16 %v2518, %v2517
    %v2597 = vpack.c.bf16 %v2520, %v2519
    %v2598 = vpack.c.bf16 %v2522, %v2521
    %v2599 = vpack.c.bf16 %v2524, %v2523
    %v2600 = vpack.c.bf16 %v2526, %v2525
    %v2601 = vpack.c.bf16 %v2528, %v2527
    %v2602 = vpack.c.bf16 %v2530, %v2529
    %v2603 = vpack.c.bf16 %v2532, %v2531
    %v2604 = vpack.c.bf16 %v2534, %v2533
    %v2605 = vpack.c.bf16 %v2536, %v2535
    %v2606 = vpack.c.bf16 %v2538, %v2537
    %v2607 = vpack.c.bf16 %v2540, %v2539
    %v2608 = vpack.c.bf16 %v2542, %v2541
    %v2609 = vpack.c.bf16 %v2544, %v2543
    %v2610 = vpack.c.bf16 %v2546, %v2545
    %v2675 = vunpack.c.l.b16 %v2547
    %v2676 = vunpack.c.h.b16 %v2547
    %v2677 = vunpack.c.l.b16 %v2548
    %v2678 = vunpack.c.h.b16 %v2548
    %v2679 = vunpack.c.l.b16 %v2549
    %v2680 = vunpack.c.h.b16 %v2549
    %v2681 = vunpack.c.l.b16 %v2550
    %v2682 = vunpack.c.h.b16 %v2550
    %v2683 = vunpack.c.l.b16 %v2551
    %v2684 = vunpack.c.h.b16 %v2551
    %v2685 = vunpack.c.l.b16 %v2552
    %v2686 = vunpack.c.h.b16 %v2552
    %v2687 = vunpack.c.l.b16 %v2553
    %v2688 = vunpack.c.h.b16 %v2553
    %v2689 = vunpack.c.l.b16 %v2554
    %v2690 = vunpack.c.h.b16 %v2554
    %v2691 = vunpack.c.l.b16 %v2555
    %v2692 = vunpack.c.h.b16 %v2555
    %v2693 = vunpack.c.l.b16 %v2556
    %v2694 = vunpack.c.h.b16 %v2556
    %v2695 = vunpack.c.l.b16 %v2557
    %v2696 = vunpack.c.h.b16 %v2557
    %v2697 = vunpack.c.l.b16 %v2558
    %v2698 = vunpack.c.h.b16 %v2558
    %v2699 = vunpack.c.l.b16 %v2559
    %v2700 = vunpack.c.h.b16 %v2559
    %v2701 = vunpack.c.l.b16 %v2560
    %v2702 = vunpack.c.h.b16 %v2560
    %v2703 = vunpack.c.l.b16 %v2561
    %v2704 = vunpack.c.h.b16 %v2561
    %v2705 = vunpack.c.l.b16 %v2562
    %v2706 = vunpack.c.h.b16 %v2562
    %v2707 = vunpack.c.l.b16 %v2563
    %v2708 = vunpack.c.h.b16 %v2563
    %v2709 = vunpack.c.l.b16 %v2564
    %v2710 = vunpack.c.h.b16 %v2564
    %v2711 = vunpack.c.l.b16 %v2565
    %v2712 = vunpack.c.h.b16 %v2565
    %v2713 = vunpack.c.l.b16 %v2566
    %v2714 = vunpack.c.h.b16 %v2566
    %v2715 = vunpack.c.l.b16 %v2567
    %v2716 = vunpack.c.h.b16 %v2567
    %v2717 = vunpack.c.l.b16 %v2568
    %v2718 = vunpack.c.h.b16 %v2568
    %v2719 = vunpack.c.l.b16 %v2569
    %v2720 = vunpack.c.h.b16 %v2569
    %v2721 = vunpack.c.l.b16 %v2570
    %v2722 = vunpack.c.h.b16 %v2570
    %v2723 = vunpack.c.l.b16 %v2571
    %v2724 = vunpack.c.h.b16 %v2571
    %v2725 = vunpack.c.l.b16 %v2572
    %v2726 = vunpack.c.h.b16 %v2572
    %v2727 = vunpack.c.l.b16 %v2573
    %v2728 = vunpack.c.h.b16 %v2573
    %v2729 = vunpack.c.l.b16 %v2574
    %v2730 = vunpack.c.h.b16 %v2574
    %v2731 = vunpack.c.l.b16 %v2575
    %v2732 = vunpack.c.h.b16 %v2575
    %v2733 = vunpack.c.l.b16 %v2576
    %v2734 = vunpack.c.h.b16 %v2576
    %v2735 = vunpack.c.l.b16 %v2577
    %v2736 = vunpack.c.h.b16 %v2577
    %v2737 = vunpack.c.l.b16 %v2578
    %v2738 = vunpack.c.h.b16 %v2578
    %v2739 = vunpack.c.l.b16 %v2579
    %v2740 = vunpack.c.h.b16 %v2579
    %v2741 = vunpack.c.l.b16 %v2580
    %v2742 = vunpack.c.h.b16 %v2580
    %v2743 = vunpack.c.l.b16 %v2581
    %v2744 = vunpack.c.h.b16 %v2581
    %v2745 = vunpack.c.l.b16 %v2582
    %v2746 = vunpack.c.h.b16 %v2582
    %v2747 = vunpack.c.l.b16 %v2583
    %v2748 = vunpack.c.h.b16 %v2583
    %v2749 = vunpack.c.l.b16 %v2584
    %v2750 = vunpack.c.h.b16 %v2584
    %v2751 = vunpack.c.l.b16 %v2585
    %v2752 = vunpack.c.h.b16 %v2585
    %v2753 = vunpack.c.l.b16 %v2586
    %v2754 = vunpack.c.h.b16 %v2586
    %v2755 = vunpack.c.l.b16 %v2587
    %v2756 = vunpack.c.h.b16 %v2587
    %v2757 = vunpack.c.l.b16 %v2588
    %v2758 = vunpack.c.h.b16 %v2588
    %v2759 = vunpack.c.l.b16 %v2589
    %v2760 = vunpack.c.h.b16 %v2589
    %v2761 = vunpack.c.l.b16 %v2590
    %v2762 = vunpack.c.h.b16 %v2590
    %v2763 = vunpack.c.l.b16 %v2591
    %v2764 = vunpack.c.h.b16 %v2591
    %v2765 = vunpack.c.l.b16 %v2592
    %v2766 = vunpack.c.h.b16 %v2592
    %v2767 = vunpack.c.l.b16 %v2593
    %v2768 = vunpack.c.h.b16 %v2593
    %v2769 = vunpack.c.l.b16 %v2594
    %v2770 = vunpack.c.h.b16 %v2594
    %v2771 = vunpack.c.l.b16 %v2595
    %v2772 = vunpack.c.h.b16 %v2595
    %v2773 = vunpack.c.l.b16 %v2596
    %v2774 = vunpack.c.h.b16 %v2596
    %v2775 = vunpack.c.l.b16 %v2597
    %v2776 = vunpack.c.h.b16 %v2597
    %v2777 = vunpack.c.l.b16 %v2598
    %v2778 = vunpack.c.h.b16 %v2598
    %v2779 = vunpack.c.l.b16 %v2599
    %v2780 = vunpack.c.h.b16 %v2599
    %v2781 = vunpack.c.l.b16 %v2600
    %v2782 = vunpack.c.h.b16 %v2600
    %v2783 = vunpack.c.l.b16 %v2601
    %v2784 = vunpack.c.h.b16 %v2601
    %v2785 = vunpack.c.l.b16 %v2602
    %v2786 = vunpack.c.h.b16 %v2602
    %v2787 = vunpack.c.l.b16 %v2603
    %v2788 = vunpack.c.h.b16 %v2603
    %v2789 = vunpack.c.l.b16 %v2604
    %v2790 = vunpack.c.h.b16 %v2604
    %v2791 = vunpack.c.l.b16 %v2605
    %v2792 = vunpack.c.h.b16 %v2605
    %v2793 = vunpack.c.l.b16 %v2606
    %v2794 = vunpack.c.h.b16 %v2606
    %v2795 = vunpack.c.l.b16 %v2607
    %v2796 = vunpack.c.h.b16 %v2607
    %v2797 = vunpack.c.l.b16 %v2608
    %v2798 = vunpack.c.h.b16 %v2608
    %v2799 = vunpack.c.l.b16 %v2609
    %v2800 = vunpack.c.h.b16 %v2609
    %v2801 = vunpack.c.l.b16 %v2610
    %v2802 = vunpack.c.h.b16 %v2610
    %v2803 = vpack.c.b16 %v2675, %v2675
    %v2804 = vpack.c.b16 %v2676, %v2676
    %v2805 = vpack.c.b16 %v2677, %v2677
    %v2806 = vpack.c.b16 %v2678, %v2678
    %v2807 = vpack.c.b16 %v2679, %v2679
    %v2808 = vpack.c.b16 %v2680, %v2680
    %v2809 = vpack.c.b16 %v2681, %v2681
    %v2810 = vpack.c.b16 %v2682, %v2682
    %v2811 = vpack.c.b16 %v2683, %v2683
    %v2812 = vpack.c.b16 %v2684, %v2684
    %v2813 = vpack.c.b16 %v2685, %v2685
    %v2814 = vpack.c.b16 %v2686, %v2686
    %v2815 = vpack.c.b16 %v2687, %v2687
    %v2816 = vpack.c.b16 %v2688, %v2688
    %v2817 = vpack.c.b16 %v2689, %v2689
    %v2818 = vpack.c.b16 %v2690, %v2690
    %v2819 = vpack.c.b16 %v2691, %v2691
    %v2820 = vpack.c.b16 %v2692, %v2692
    %v2821 = vpack.c.b16 %v2693, %v2693
    %v2822 = vpack.c.b16 %v2694, %v2694
    %v2823 = vpack.c.b16 %v2695, %v2695
    %v2824 = vpack.c.b16 %v2696, %v2696
    %v2825 = vpack.c.b16 %v2697, %v2697
    %v2826 = vpack.c.b16 %v2698, %v2698
    %v2827 = vpack.c.b16 %v2699, %v2699
    %v2828 = vpack.c.b16 %v2700, %v2700
    %v2829 = vpack.c.b16 %v2701, %v2701
    %v2830 = vpack.c.b16 %v2702, %v2702
    %v2831 = vpack.c.b16 %v2703, %v2703
    %v2832 = vpack.c.b16 %v2704, %v2704
    %v2833 = vpack.c.b16 %v2705, %v2705
    %v2834 = vpack.c.b16 %v2706, %v2706
    %v2835 = vpack.c.b16 %v2707, %v2707
    %v2836 = vpack.c.b16 %v2708, %v2708
    %v2837 = vpack.c.b16 %v2709, %v2709
    %v2838 = vpack.c.b16 %v2710, %v2710
    %v2839 = vpack.c.b16 %v2711, %v2711
    %v2840 = vpack.c.b16 %v2712, %v2712
    %v2841 = vpack.c.b16 %v2713, %v2713
    %v2842 = vpack.c.b16 %v2714, %v2714
    %v2843 = vpack.c.b16 %v2715, %v2715
    %v2844 = vpack.c.b16 %v2716, %v2716
    %v2845 = vpack.c.b16 %v2717, %v2717
    %v2846 = vpack.c.b16 %v2718, %v2718
    %v2847 = vpack.c.b16 %v2719, %v2719
    %v2848 = vpack.c.b16 %v2720, %v2720
    %v2849 = vpack.c.b16 %v2721, %v2721
    %v2850 = vpack.c.b16 %v2722, %v2722
    %v2851 = vpack.c.b16 %v2723, %v2723
    %v2852 = vpack.c.b16 %v2724, %v2724
    %v2853 = vpack.c.b16 %v2725, %v2725
    %v2854 = vpack.c.b16 %v2726, %v2726
    %v2855 = vpack.c.b16 %v2727, %v2727
    %v2856 = vpack.c.b16 %v2728, %v2728
    %v2857 = vpack.c.b16 %v2729, %v2729
    %v2858 = vpack.c.b16 %v2730, %v2730
    %v2859 = vpack.c.b16 %v2731, %v2731
    %v2860 = vpack.c.b16 %v2732, %v2732
    %v2861 = vpack.c.b16 %v2733, %v2733
    %v2862 = vpack.c.b16 %v2734, %v2734
    %v2863 = vpack.c.b16 %v2735, %v2735
    %v2864 = vpack.c.b16 %v2736, %v2736
    %v2865 = vpack.c.b16 %v2737, %v2737
    %v2866 = vpack.c.b16 %v2738, %v2738
    %v2867 = vpack.c.b16 %v2739, %v2739
    %v2868 = vpack.c.b16 %v2740, %v2740
    %v2869 = vpack.c.b16 %v2741, %v2741
    %v2870 = vpack.c.b16 %v2742, %v2742
    %v2871 = vpack.c.b16 %v2743, %v2743
    %v2872 = vpack.c.b16 %v2744, %v2744
    %v2873 = vpack.c.b16 %v2745, %v2745
    %v2874 = vpack.c.b16 %v2746, %v2746
    %v2875 = vpack.c.b16 %v2747, %v2747
    %v2876 = vpack.c.b16 %v2748, %v2748
    %v2877 = vpack.c.b16 %v2749, %v2749
    %v2878 = vpack.c.b16 %v2750, %v2750
    %v2879 = vpack.c.b16 %v2751, %v2751
    %v2880 = vpack.c.b16 %v2752, %v2752
    %v2881 = vpack.c.b16 %v2753, %v2753
    %v2882 = vpack.c.b16 %v2754, %v2754
    %v2883 = vpack.c.b16 %v2755, %v2755
    %v2884 = vpack.c.b16 %v2756, %v2756
    %v2885 = vpack.c.b16 %v2757, %v2757
    %v2886 = vpack.c.b16 %v2758, %v2758
    %v2887 = vpack.c.b16 %v2759, %v2759
    %v2888 = vpack.c.b16 %v2760, %v2760
    %v2889 = vpack.c.b16 %v2761, %v2761
    %v2890 = vpack.c.b16 %v2762, %v2762
    %v2891 = vpack.c.b16 %v2763, %v2763
    %v2892 = vpack.c.b16 %v2764, %v2764
    %v2893 = vpack.c.b16 %v2765, %v2765
    %v2894 = vpack.c.b16 %v2766, %v2766
    %v2895 = vpack.c.b16 %v2767, %v2767
    %v2896 = vpack.c.b16 %v2768, %v2768
    %v2897 = vpack.c.b16 %v2769, %v2769
    %v2898 = vpack.c.b16 %v2770, %v2770
    %v2899 = vpack.c.b16 %v2771, %v2771
    %v2900 = vpack.c.b16 %v2772, %v2772
    %v2901 = vpack.c.b16 %v2773, %v2773
    %v2902 = vpack.c.b16 %v2774, %v2774
    %v2903 = vpack.c.b16 %v2775, %v2775
    %v2904 = vpack.c.b16 %v2776, %v2776
    %v2905 = vpack.c.b16 %v2777, %v2777
    %v2906 = vpack.c.b16 %v2778, %v2778
    %v2907 = vpack.c.b16 %v2779, %v2779
    %v2908 = vpack.c.b16 %v2780, %v2780
    %v2909 = vpack.c.b16 %v2781, %v2781
    %v2910 = vpack.c.b16 %v2782, %v2782
    %v2911 = vpack.c.b16 %v2783, %v2783
    %v2912 = vpack.c.b16 %v2784, %v2784
    %v2913 = vpack.c.b16 %v2785, %v2785
    %v2914 = vpack.c.b16 %v2786, %v2786
    %v2915 = vpack.c.b16 %v2787, %v2787
    %v2916 = vpack.c.b16 %v2788, %v2788
    %v2917 = vpack.c.b16 %v2789, %v2789
    %v2918 = vpack.c.b16 %v2790, %v2790
    %v2919 = vpack.c.b16 %v2791, %v2791
    %v2920 = vpack.c.b16 %v2792, %v2792
    %v2921 = vpack.c.b16 %v2793, %v2793
    %v2922 = vpack.c.b16 %v2794, %v2794
    %v2923 = vpack.c.b16 %v2795, %v2795
    %v2924 = vpack.c.b16 %v2796, %v2796
    %v2925 = vpack.c.b16 %v2797, %v2797
    %v2926 = vpack.c.b16 %v2798, %v2798
    %v2927 = vpack.c.b16 %v2799, %v2799
    %v2928 = vpack.c.b16 %v2800, %v2800
    %v2929 = vpack.c.b16 %v2801, %v2801
    %v2930 = vpack.c.b16 %v2802, %v2802
    %3059 = vst [vmem:[#allocation4] sm:$0xf] %v2803
    %3060 = vst [vmem:[#allocation4 + $0x4] sm:$0xf] %v2804
    %3061 = vst [vmem:[#allocation4 + $0x8] sm:$0xf] %v2805
    %3062 = vst [vmem:[#allocation4 + $0xc] sm:$0xf] %v2806
    %3063 = vst [vmem:[#allocation4 + $0x10] sm:$0xf] %v2807
    %3064 = vst [vmem:[#allocation4 + $0x14] sm:$0xf] %v2808
    %3065 = vst [vmem:[#allocation4 + $0x18] sm:$0xf] %v2809
    %3066 = vst [vmem:[#allocation4 + $0x1c] sm:$0xf] %v2810
    %3067 = vst [vmem:[#allocation4 + $0x20] sm:$0xf] %v2811
    %3068 = vst [vmem:[#allocation4 + $0x24] sm:$0xf] %v2812
    %3069 = vst [vmem:[#allocation4 + $0x28] sm:$0xf] %v2813
    %3070 = vst [vmem:[#allocation4 + $0x2c] sm:$0xf] %v2814
    %3071 = vst [vmem:[#allocation4 + $0x30] sm:$0xf] %v2815
    %3072 = vst [vmem:[#allocation4 + $0x34] sm:$0xf] %v2816
    %3073 = vst [vmem:[#allocation4 + $0x38] sm:$0xf] %v2817
    %3074 = vst [vmem:[#allocation4 + $0x3c] sm:$0xf] %v2818
    %3075 = vst [vmem:[#allocation4 + $0x40] sm:$0xf] %v2819
    %3076 = vst [vmem:[#allocation4 + $0x44] sm:$0xf] %v2820
    %3077 = vst [vmem:[#allocation4 + $0x48] sm:$0xf] %v2821
    %3078 = vst [vmem:[#allocation4 + $0x4c] sm:$0xf] %v2822
    %3079 = vst [vmem:[#allocation4 + $0x50] sm:$0xf] %v2823
    %3080 = vst [vmem:[#allocation4 + $0x54] sm:$0xf] %v2824
    %3081 = vst [vmem:[#allocation4 + $0x58] sm:$0xf] %v2825
    %3082 = vst [vmem:[#allocation4 + $0x5c] sm:$0xf] %v2826
    %3083 = vst [vmem:[#allocation4 + $0x60] sm:$0xf] %v2827
    %3084 = vst [vmem:[#allocation4 + $0x64] sm:$0xf] %v2828
    %3085 = vst [vmem:[#allocation4 + $0x68] sm:$0xf] %v2829
    %3086 = vst [vmem:[#allocation4 + $0x6c] sm:$0xf] %v2830
    %3087 = vst [vmem:[#allocation4 + $0x70] sm:$0xf] %v2831
    %3088 = vst [vmem:[#allocation4 + $0x74] sm:$0xf] %v2832
    %3089 = vst [vmem:[#allocation4 + $0x78] sm:$0xf] %v2833
    %3090 = vst [vmem:[#allocation4 + $0x7c] sm:$0xf] %v2834
    %3091 = vst [vmem:[#allocation4 + $0x80] sm:$0xf] %v2835
    %3092 = vst [vmem:[#allocation4 + $0x84] sm:$0xf] %v2836
    %3093 = vst [vmem:[#allocation4 + $0x88] sm:$0xf] %v2837
    %3094 = vst [vmem:[#allocation4 + $0x8c] sm:$0xf] %v2838
    %3095 = vst [vmem:[#allocation4 + $0x90] sm:$0xf] %v2839
    %3096 = vst [vmem:[#allocation4 + $0x94] sm:$0xf] %v2840
    %3097 = vst [vmem:[#allocation4 + $0x98] sm:$0xf] %v2841
    %3098 = vst [vmem:[#allocation4 + $0x9c] sm:$0xf] %v2842
    %3099 = vst [vmem:[#allocation4 + $0xa0] sm:$0xf] %v2843
    %3100 = vst [vmem:[#allocation4 + $0xa4] sm:$0xf] %v2844
    %3101 = vst [vmem:[#allocation4 + $0xa8] sm:$0xf] %v2845
    %3102 = vst [vmem:[#allocation4 + $0xac] sm:$0xf] %v2846
    %3103 = vst [vmem:[#allocation4 + $0xb0] sm:$0xf] %v2847
    %3104 = vst [vmem:[#allocation4 + $0xb4] sm:$0xf] %v2848
    %3105 = vst [vmem:[#allocation4 + $0xb8] sm:$0xf] %v2849
    %3106 = vst [vmem:[#allocation4 + $0xbc] sm:$0xf] %v2850
    %3107 = vst [vmem:[#allocation4 + $0xc0] sm:$0xf] %v2851
    %3108 = vst [vmem:[#allocation4 + $0xc4] sm:$0xf] %v2852
    %3109 = vst [vmem:[#allocation4 + $0xc8] sm:$0xf] %v2853
    %3110 = vst [vmem:[#allocation4 + $0xcc] sm:$0xf] %v2854
    %3111 = vst [vmem:[#allocation4 + $0xd0] sm:$0xf] %v2855
    %3112 = vst [vmem:[#allocation4 + $0xd4] sm:$0xf] %v2856
    %3113 = vst [vmem:[#allocation4 + $0xd8] sm:$0xf] %v2857
    %3114 = vst [vmem:[#allocation4 + $0xdc] sm:$0xf] %v2858
    %3115 = vst [vmem:[#allocation4 + $0xe0] sm:$0xf] %v2859
    %3116 = vst [vmem:[#allocation4 + $0xe4] sm:$0xf] %v2860
    %3117 = vst [vmem:[#allocation4 + $0xe8] sm:$0xf] %v2861
    %3118 = vst [vmem:[#allocation4 + $0xec] sm:$0xf] %v2862
    %3119 = vst [vmem:[#allocation4 + $0xf0] sm:$0xf] %v2863
    %3120 = vst [vmem:[#allocation4 + $0xf4] sm:$0xf] %v2864
    %3121 = vst [vmem:[#allocation4 + $0xf8] sm:$0xf] %v2865
    %3122 = vst [vmem:[#allocation4 + $0xfc] sm:$0xf] %v2866
    %3123 = vst [vmem:[#allocation4 + $0x100] sm:$0xf] %v2867
    %3124 = vst [vmem:[#allocation4 + $0x104] sm:$0xf] %v2868
    %3125 = vst [vmem:[#allocation4 + $0x108] sm:$0xf] %v2869
    %3126 = vst [vmem:[#allocation4 + $0x10c] sm:$0xf] %v2870
    %3127 = vst [vmem:[#allocation4 + $0x110] sm:$0xf] %v2871
    %3128 = vst [vmem:[#allocation4 + $0x114] sm:$0xf] %v2872
    %3129 = vst [vmem:[#allocation4 + $0x118] sm:$0xf] %v2873
    %3130 = vst [vmem:[#allocation4 + $0x11c] sm:$0xf] %v2874
    %3131 = vst [vmem:[#allocation4 + $0x120] sm:$0xf] %v2875
    %3132 = vst [vmem:[#allocation4 + $0x124] sm:$0xf] %v2876
    %3133 = vst [vmem:[#allocation4 + $0x128] sm:$0xf] %v2877
    %3134 = vst [vmem:[#allocation4 + $0x12c] sm:$0xf] %v2878
    %3135 = vst [vmem:[#allocation4 + $0x130] sm:$0xf] %v2879
    %3136 = vst [vmem:[#allocation4 + $0x134] sm:$0xf] %v2880
    %3137 = vst [vmem:[#allocation4 + $0x138] sm:$0xf] %v2881
    %3138 = vst [vmem:[#allocation4 + $0x13c] sm:$0xf] %v2882
    %3139 = vst [vmem:[#allocation4 + $0x140] sm:$0xf] %v2883
    %3140 = vst [vmem:[#allocation4 + $0x144] sm:$0xf] %v2884
    %3141 = vst [vmem:[#allocation4 + $0x148] sm:$0xf] %v2885
    %3142 = vst [vmem:[#allocation4 + $0x14c] sm:$0xf] %v2886
    %3143 = vst [vmem:[#allocation4 + $0x150] sm:$0xf] %v2887
    %3144 = vst [vmem:[#allocation4 + $0x154] sm:$0xf] %v2888
    %3145 = vst [vmem:[#allocation4 + $0x158] sm:$0xf] %v2889
    %3146 = vst [vmem:[#allocation4 + $0x15c] sm:$0xf] %v2890
    %3147 = vst [vmem:[#allocation4 + $0x160] sm:$0xf] %v2891
    %3148 = vst [vmem:[#allocation4 + $0x164] sm:$0xf] %v2892
    %3149 = vst [vmem:[#allocation4 + $0x168] sm:$0xf] %v2893
    %3150 = vst [vmem:[#allocation4 + $0x16c] sm:$0xf] %v2894
    %3151 = vst [vmem:[#allocation4 + $0x170] sm:$0xf] %v2895
    %3152 = vst [vmem:[#allocation4 + $0x174] sm:$0xf] %v2896
    %3153 = vst [vmem:[#allocation4 + $0x178] sm:$0xf] %v2897
    %3154 = vst [vmem:[#allocation4 + $0x17c] sm:$0xf] %v2898
    %3155 = vst [vmem:[#allocation4 + $0x180] sm:$0xf] %v2899
    %3156 = vst [vmem:[#allocation4 + $0x184] sm:$0xf] %v2900
    %3157 = vst [vmem:[#allocation4 + $0x188] sm:$0xf] %v2901
    %3158 = vst [vmem:[#allocation4 + $0x18c] sm:$0xf] %v2902
    %3159 = vst [vmem:[#allocation4 + $0x190] sm:$0xf] %v2903
    %3160 = vst [vmem:[#allocation4 + $0x194] sm:$0xf] %v2904
    %3161 = vst [vmem:[#allocation4 + $0x198] sm:$0xf] %v2905
    %3162 = vst [vmem:[#allocation4 + $0x19c] sm:$0xf] %v2906
    %3163 = vst [vmem:[#allocation4 + $0x1a0] sm:$0xf] %v2907
    %3164 = vst [vmem:[#allocation4 + $0x1a4] sm:$0xf] %v2908
    %3165 = vst [vmem:[#allocation4 + $0x1a8] sm:$0xf] %v2909
    %3166 = vst [vmem:[#allocation4 + $0x1ac] sm:$0xf] %v2910
    %3167 = vst [vmem:[#allocation4 + $0x1b0] sm:$0xf] %v2911
    %3168 = vst [vmem:[#allocation4 + $0x1b4] sm:$0xf] %v2912
    %3169 = vst [vmem:[#allocation4 + $0x1b8] sm:$0xf] %v2913
    %3170 = vst [vmem:[#allocation4 + $0x1bc] sm:$0xf] %v2914
    %3171 = vst [vmem:[#allocation4 + $0x1c0] sm:$0xf] %v2915
    %3172 = vst [vmem:[#allocation4 + $0x1c4] sm:$0xf] %v2916
    %3173 = vst [vmem:[#allocation4 + $0x1c8] sm:$0xf] %v2917
    %3174 = vst [vmem:[#allocation4 + $0x1cc] sm:$0xf] %v2918
    %3175 = vst [vmem:[#allocation4 + $0x1d0] sm:$0xf] %v2919
    %3176 = vst [vmem:[#allocation4 + $0x1d4] sm:$0xf] %v2920
    %3177 = vst [vmem:[#allocation4 + $0x1d8] sm:$0xf] %v2921
    %3178 = vst [vmem:[#allocation4 + $0x1dc] sm:$0xf] %v2922
    %3179 = vst [vmem:[#allocation4 + $0x1e0] sm:$0xf] %v2923
    %3180 = vst [vmem:[#allocation4 + $0x1e4] sm:$0xf] %v2924
    %3181 = vst [vmem:[#allocation4 + $0x1e8] sm:$0xf] %v2925
    %3182 = vst [vmem:[#allocation4 + $0x1ec] sm:$0xf] %v2926
    %3183 = vst [vmem:[#allocation4 + $0x1f0] sm:$0xf] %v2927
    %3184 = vst [vmem:[#allocation4 + $0x1f4] sm:$0xf] %v2928
    %3185 = vst [vmem:[#allocation4 + $0x1f8] sm:$0xf] %v2929
    %3186 = vst [vmem:[#allocation4 + $0x1fc] sm:$0xf] %v2930
    // Predicated region
    $region18: #{tpu_custom_call.1} parent=1 // pred_check
      _
    $region19: #{tpu_custom_call.1} parent=1 // pred_check_branch
      %3188 = sbr.rel (0) target = $region21
    $region20: #{tpu_custom_call.1} parent=1 // pred_region
      %s3190 = ssub.s32 8192, 8192
      %3191 = vsyncadd [#allocation3], %s3190
      %s3192 = sshll.u32 [#allocation2], 4
      %s3193 = int_to_ptr.vmem [resolvable:$true] %s3192
      %3198 = dma.vmem_to_hbm [thread:$0]  %s3193, 8192, %s4, [#allocation3], 64, 64, 4
    $region21: #{tpu_custom_call.1} parent=1 // pred_fallthru
      _
    // Predicated region
    $region22: #{tpu_custom_call.1} parent=1 // pred_check
      _
    $region23: #{tpu_custom_call.1} parent=1 // pred_check_branch
      %3200 = sbr.rel (0) target = $region25
    $region24: #{tpu_custom_call.1} parent=1 // pred_region
      %s3202 = ssub.s32 8192, 8192
      %3203 = vsyncadd [#allocation5], %s3202
      %s3204 = sshll.u32 [#allocation4], 4
      %s3205 = int_to_ptr.vmem [resolvable:$true] %s3204
      %3210 = dma.vmem_to_hbm [thread:$0]  %s3205, 8192, %s5, [#allocation5], 64, 64, 4
    $region25: #{tpu_custom_call.1} parent=1 // pred_fallthru
      _
    // Predicated region
    $region26: #{tpu_custom_call.1} parent=1 // pred_check
      _
    $region27: #{tpu_custom_call.1} parent=1 // pred_check_branch
      %3212 = sbr.rel (0) target = $region29
    $region28: #{tpu_custom_call.1} parent=1 // pred_region
      %3213 = dma.done [#allocation3], 8192
    $region29: #{tpu_custom_call.1} parent=1 // pred_fallthru
      _
    // Predicated region
    $region30: #{tpu_custom_call.1} parent=1 // pred_check
      _
    $region31: #{tpu_custom_call.1} parent=1 // pred_check_branch
      %3215 = sbr.rel (0) target = $region33
    $region32: #{tpu_custom_call.1} parent=1 // pred_region
      %3216 = dma.done [#allocation5], 8192
    $region33: #{tpu_custom_call.1} parent=1 // pred_fallthru
      _
    %3217 = vsyncpa [#allocation3], 1
    %3218 = vsyncpa [#allocation5], 1

</llo_original>
